<compile_context>
chip_gen: v6e
topology: v6e:2x2x1
jax: 0.10.0
libtpu: 0.0.40
codegen_flags: <defaults>
</compile_context>

<pallas_src>
import math

import jax
import jax.numpy as jnp
from jax.experimental import pallas as pl
from jax.experimental.pallas import tpu as pltpu

# ---------------- config (small, deterministic) ----------------
B, S, H = 2, 8, 32
N_HEADS = 2
D_HEAD = H // N_HEADS
FF = 64
N_LAYERS = 2
VOCAB = 64
SEG_VOCAB = 3
SEG_PAD = 8            # seg embedding table padded to 8 rows (tile-friendly K)
LN_EPS = 1e-6
N_TOK = B * S


# ---------------- the single fused encoder kernel ----------------
def _encoder_kernel(src_ref, seg_ref, pos_ref, bias_ref,
                    wemb_ref, pemb_ref, semb_ref, eg_ref, eb_ref,
                    wqkv_ref, bqkv_ref, wo_ref, bo_ref,
                    ln1g_ref, ln1b_ref, w1_ref, b1_ref, w2_ref, b2_ref,
                    ln2g_ref, ln2b_ref, o_ref):
    def one_hot(ids, depth):
        # ids: (N_TOK, 1) int32 -> (N_TOK, depth) f32
        cols = jax.lax.broadcasted_iota(jnp.int32, (N_TOK, depth), 1)
        return (ids == cols).astype(jnp.float32)

    def layer_norm(x, g, b):
        mu = jnp.mean(x, axis=-1, keepdims=True)
        var = jnp.mean(jnp.square(x - mu), axis=-1, keepdims=True)
        return (x - mu) * jax.lax.rsqrt(var + LN_EPS) * g + b

    def gelu(x):
        # exact (erf) GELU, matching UER-py / torch default
        return 0.5 * x * (1.0 + jax.lax.erf(x * (1.0 / math.sqrt(2.0))))

    # ----- embedding: one-hot gathers on the MXU, add, LayerNorm -----
    emb = jnp.dot(one_hot(src_ref[...], VOCAB), wemb_ref[...],
                  preferred_element_type=jnp.float32)
    emb = emb + jnp.dot(one_hot(pos_ref[...], S), pemb_ref[...],
                        preferred_element_type=jnp.float32)
    emb = emb + jnp.dot(one_hot(seg_ref[...], SEG_PAD), semb_ref[...],
                        preferred_element_type=jnp.float32)
    x = layer_norm(emb, eg_ref[...], eb_ref[...])

    bias = bias_ref[...]                       # (N_TOK, N_TOK) additive mask
    scale = 1.0 / math.sqrt(D_HEAD)

    # ----- encoder layers, statically unrolled, all weights in VMEM -----
    for l in range(N_LAYERS):
        # fused QKV projection: one MXU push, lane-dense width-3H result
        qkv = (jnp.dot(x, wqkv_ref[l], preferred_element_type=jnp.float32)
               + bqkv_ref[l])                  # (N_TOK, 3H)
        wo_l = wo_ref[l]                       # (H, H)

        # multi-head attention; output projection folded per head
        attn = bo_ref[l]                       # (1, H), broadcasts up
        for hd in range(N_HEADS):
            qh = qkv[:, hd * D_HEAD:(hd + 1) * D_HEAD]
            kh = qkv[:, H + hd * D_HEAD:H + (hd + 1) * D_HEAD]
            vh = qkv[:, 2 * H + hd * D_HEAD:2 * H + (hd + 1) * D_HEAD]
            s = (jnp.dot(qh, kh.T, preferred_element_type=jnp.float32) * scale
                 + bias)
            s = s - jnp.max(s, axis=-1, keepdims=True)
            p = jnp.exp(s)
            p = p * pl.reciprocal(jnp.sum(p, axis=-1, keepdims=True),
                                  approx=True)
            ctx = jnp.dot(p, vh, preferred_element_type=jnp.float32)
            attn = attn + jnp.dot(ctx, wo_l[hd * D_HEAD:(hd + 1) * D_HEAD, :],
                                  preferred_element_type=jnp.float32)

        y = layer_norm(attn + x, ln1g_ref[l], ln1b_ref[l])          # post-LN
        ff = (jnp.dot(y, w1_ref[l], preferred_element_type=jnp.float32)
              + b1_ref[l])
        ff = gelu(ff)
        ff = (jnp.dot(ff, w2_ref[l], preferred_element_type=jnp.float32)
              + b2_ref[l])
        x = layer_norm(ff + y, ln2g_ref[l], ln2b_ref[l])            # post-LN

    o_ref[...] = x


# ---------------- params ----------------
def init_params(key):
    keys = iter(jax.random.split(key, 8))

    def nrm(shape):
        return 0.02 * jax.random.normal(next(keys), shape, jnp.float32)

    return {
        "word_emb": nrm((VOCAB, H)),
        "pos_emb": nrm((S, H)),
        "seg_emb": nrm((SEG_VOCAB, H)),
        "emb_ln_g": jnp.ones((1, H), jnp.float32),
        "emb_ln_b": jnp.zeros((1, H), jnp.float32),
        # fused QKV weight = concat(wq | wk | wv) along the output dim
        "wqkv": nrm((N_LAYERS, H, 3 * H)),
        "bqkv": jnp.zeros((N_LAYERS, 1, 3 * H), jnp.float32),
        "wo": nrm((N_LAYERS, H, H)),
        "bo": jnp.zeros((N_LAYERS, 1, H), jnp.float32),
        "ln1_g": jnp.ones((N_LAYERS, 1, H), jnp.float32),
        "ln1_b": jnp.zeros((N_LAYERS, 1, H), jnp.float32),
        "w1": nrm((N_LAYERS, H, FF)),
        "b1": jnp.zeros((N_LAYERS, 1, FF), jnp.float32),
        "w2": nrm((N_LAYERS, FF, H)),
        "b2": jnp.zeros((N_LAYERS, 1, H), jnp.float32),
        "ln2_g": jnp.ones((N_LAYERS, 1, H), jnp.float32),
        "ln2_b": jnp.zeros((N_LAYERS, 1, H), jnp.float32),
    }


# ---------------- wrapper ----------------
_VMEM = pl.BlockSpec(memory_space=pltpu.MemorySpace.VMEM)


@jax.jit
def sequence_encoder(params, src, seg):
    src_ids = src.reshape(N_TOK, 1).astype(jnp.int32)
    seg_ids = seg.reshape(N_TOK, 1).astype(jnp.int32)
    pos_ids = jnp.tile(jnp.arange(S, dtype=jnp.int32), (B,)).reshape(N_TOK, 1)

    # additive attention bias over the flattened (B*S, B*S) score tile:
    # block-diagonal across batch + key padding (seg == 0), BERT-style -1e4.
    seg_flat = seg.reshape(N_TOK)
    batch_id = jnp.arange(N_TOK, dtype=jnp.int32) // S
    same_batch = batch_id[:, None] == batch_id[None, :]
    key_valid = (seg_flat > 0)[None, :]
    attn_bias = jnp.where(same_batch & key_valid, 0.0, -10000.0).astype(
        jnp.float32)

    # pad the tiny segment table to 8 rows for a tile-friendly one-hot matmul
    seg_emb_p = jnp.zeros((SEG_PAD, H), jnp.float32).at[:SEG_VOCAB].set(
        params["seg_emb"])

    out = pl.pallas_call(
        _encoder_kernel,
        out_shape=jax.ShapeDtypeStruct((N_TOK, H), jnp.float32),
        in_specs=[_VMEM] * 21,
        out_specs=_VMEM,
    )(src_ids, seg_ids, pos_ids, attn_bias,
      params["word_emb"], params["pos_emb"], seg_emb_p,
      params["emb_ln_g"], params["emb_ln_b"],
      params["wqkv"], params["bqkv"], params["wo"], params["bo"],
      params["ln1_g"], params["ln1_b"],
      params["w1"], params["b1"], params["w2"], params["b2"],
      params["ln2_g"], params["ln2_b"])
    return out.reshape(B, S, H)


if __name__ == "__main__":
    key = jax.random.PRNGKey(0)
    pkey, skey = jax.random.split(key)
    params = init_params(pkey)

    # deterministic example inputs: token ids + segment ids (0 = padding)
    src = jax.random.randint(skey, (B, S), 1, VOCAB, dtype=jnp.int32)
    seg = jnp.concatenate(
        [jnp.ones((B, S - 2), jnp.int32), jnp.zeros((B, 2), jnp.int32)], axis=1
    )

    out = sequence_encoder(params, src, seg)
    out = jax.block_until_ready(out)
    assert out.shape == (B, S, H) and out.dtype == jnp.float32
    assert bool(jnp.all(jnp.isfinite(out)))
    print("KERNEL_OK")
</pallas_src>

<mosaic_0001>
module attributes {stable_mosaic.version = 11 : i64} {
  func.func @_encoder_kernel(%arg0: memref<16x1xi32, #tpu.memory_space<vmem>>, %arg1: memref<16x1xi32, #tpu.memory_space<vmem>>, %arg2: memref<16x1xi32, #tpu.memory_space<vmem>>, %arg3: memref<16x16xf32, #tpu.memory_space<vmem>>, %arg4: memref<64x32xf32, #tpu.memory_space<vmem>>, %arg5: memref<8x32xf32, #tpu.memory_space<vmem>>, %arg6: memref<8x32xf32, #tpu.memory_space<vmem>>, %arg7: memref<1x32xf32, #tpu.memory_space<vmem>>, %arg8: memref<1x32xf32, #tpu.memory_space<vmem>>, %arg9: memref<2x32x96xf32, #tpu.memory_space<vmem>>, %arg10: memref<2x1x96xf32, #tpu.memory_space<vmem>>, %arg11: memref<2x32x32xf32, #tpu.memory_space<vmem>>, %arg12: memref<2x1x32xf32, #tpu.memory_space<vmem>>, %arg13: memref<2x1x32xf32, #tpu.memory_space<vmem>>, %arg14: memref<2x1x32xf32, #tpu.memory_space<vmem>>, %arg15: memref<2x32x64xf32, #tpu.memory_space<vmem>>, %arg16: memref<2x1x64xf32, #tpu.memory_space<vmem>>, %arg17: memref<2x64x32xf32, #tpu.memory_space<vmem>>, %arg18: memref<2x1x32xf32, #tpu.memory_space<vmem>>, %arg19: memref<2x1x32xf32, #tpu.memory_space<vmem>>, %arg20: memref<2x1x32xf32, #tpu.memory_space<vmem>>, %arg21: memref<16x32xf32, #tpu.memory_space<vmem>>) attributes {dimension_semantics = [], scalar_prefetch = 0 : i64, scratch_operands = 0 : i64, tpu.core_type = #tpu.core_type<tc>} {
    %c0 = arith.constant 0 : index
    %c0_0 = arith.constant 0 : index
    %0 = vector.load %arg0[%c0, %c0_0] : memref<16x1xi32, #tpu.memory_space<vmem>>, vector<16x1xi32>
    %1 = tpu.iota {dimensions = array<i32: 1>} : vector<16x64xi32>
    %2 = vector.broadcast %0 : vector<16x1xi32> to vector<16x64xi32>
    %3 = arith.cmpi eq, %2, %1 : vector<16x64xi32>
    %4 = arith.extui %3 : vector<16x64xi1> to vector<16x64xi32>
    %5 = arith.sitofp %4 : vector<16x64xi32> to vector<16x64xf32>
    %c0_1 = arith.constant 0 : index
    %c0_2 = arith.constant 0 : index
    %6 = vector.load %arg4[%c0_1, %c0_2] : memref<64x32xf32, #tpu.memory_space<vmem>>, vector<64x32xf32>
    %cst = arith.constant dense<0.000000e+00> : vector<16x32xf32>
    %7 = tpu.matmul %5, %6, %cst {dimension_numbers = #tpu.dot_dimension_numbers<[1], [0], [0], [1], [0, 0, 1, 1], [], []>} : vector<16x64xf32>, vector<64x32xf32>, vector<16x32xf32> -> vector<16x32xf32>
    %c0_3 = arith.constant 0 : index
    %c0_4 = arith.constant 0 : index
    %8 = vector.load %arg2[%c0_3, %c0_4] : memref<16x1xi32, #tpu.memory_space<vmem>>, vector<16x1xi32>
    %9 = tpu.iota {dimensions = array<i32: 1>} : vector<16x8xi32>
    %10 = vector.broadcast %8 : vector<16x1xi32> to vector<16x8xi32>
    %11 = arith.cmpi eq, %10, %9 : vector<16x8xi32>
    %12 = arith.extui %11 : vector<16x8xi1> to vector<16x8xi32>
    %13 = arith.sitofp %12 : vector<16x8xi32> to vector<16x8xf32>
    %c0_5 = arith.constant 0 : index
    %c0_6 = arith.constant 0 : index
    %14 = vector.load %arg5[%c0_5, %c0_6] : memref<8x32xf32, #tpu.memory_space<vmem>>, vector<8x32xf32>
    %cst_7 = arith.constant dense<0.000000e+00> : vector<16x32xf32>
    %15 = tpu.matmul %13, %14, %cst_7 {dimension_numbers = #tpu.dot_dimension_numbers<[1], [0], [0], [1], [0, 0, 1, 1], [], []>} : vector<16x8xf32>, vector<8x32xf32>, vector<16x32xf32> -> vector<16x32xf32>
    %16 = arith.addf %7, %15 : vector<16x32xf32>
    %c0_8 = arith.constant 0 : index
    %c0_9 = arith.constant 0 : index
    %17 = vector.load %arg1[%c0_8, %c0_9] : memref<16x1xi32, #tpu.memory_space<vmem>>, vector<16x1xi32>
    %18 = tpu.iota {dimensions = array<i32: 1>} : vector<16x8xi32>
    %19 = vector.broadcast %17 : vector<16x1xi32> to vector<16x8xi32>
    %20 = arith.cmpi eq, %19, %18 : vector<16x8xi32>
    %21 = arith.extui %20 : vector<16x8xi1> to vector<16x8xi32>
    %22 = arith.sitofp %21 : vector<16x8xi32> to vector<16x8xf32>
    %c0_10 = arith.constant 0 : index
    %c0_11 = arith.constant 0 : index
    %23 = vector.load %arg6[%c0_10, %c0_11] : memref<8x32xf32, #tpu.memory_space<vmem>>, vector<8x32xf32>
    %cst_12 = arith.constant dense<0.000000e+00> : vector<16x32xf32>
    %24 = tpu.matmul %22, %23, %cst_12 {dimension_numbers = #tpu.dot_dimension_numbers<[1], [0], [0], [1], [0, 0, 1, 1], [], []>} : vector<16x8xf32>, vector<8x32xf32>, vector<16x32xf32> -> vector<16x32xf32>
    %25 = arith.addf %16, %24 : vector<16x32xf32>
    %c0_13 = arith.constant 0 : index
    %c0_14 = arith.constant 0 : index
    %26 = vector.load %arg7[%c0_13, %c0_14] : memref<1x32xf32, #tpu.memory_space<vmem>>, vector<1x32xf32>
    %c0_15 = arith.constant 0 : index
    %c0_16 = arith.constant 0 : index
    %27 = vector.load %arg8[%c0_15, %c0_16] : memref<1x32xf32, #tpu.memory_space<vmem>>, vector<1x32xf32>
    %cst_17 = arith.constant dense<0.000000e+00> : vector<16xf32>
    %28 = vector.multi_reduction <add>, %25, %cst_17 [1] : vector<16x32xf32> to vector<16xf32>
    %29 = vector.shape_cast %28 : vector<16xf32> to vector<16x1xf32>
    %cst_18 = arith.constant 3.200000e+01 : f32
    %30 = vector.broadcast %cst_18 : f32 to vector<16x1xf32>
    %31 = arith.divf %29, %30 : vector<16x1xf32>
    %32 = vector.broadcast %31 : vector<16x1xf32> to vector<16x32xf32>
    %33 = arith.subf %25, %32 : vector<16x32xf32>
    %34 = arith.mulf %33, %33 : vector<16x32xf32>
    %cst_19 = arith.constant dense<0.000000e+00> : vector<16xf32>
    %35 = vector.multi_reduction <add>, %34, %cst_19 [1] : vector<16x32xf32> to vector<16xf32>
    %36 = vector.shape_cast %35 : vector<16xf32> to vector<16x1xf32>
    %cst_20 = arith.constant 3.200000e+01 : f32
    %37 = vector.broadcast %cst_20 : f32 to vector<16x1xf32>
    %38 = arith.divf %36, %37 : vector<16x1xf32>
    %39 = vector.broadcast %31 : vector<16x1xf32> to vector<16x32xf32>
    %40 = arith.subf %25, %39 : vector<16x32xf32>
    %cst_21 = arith.constant 9.99999997E-7 : f32
    %41 = vector.broadcast %cst_21 : f32 to vector<16x1xf32>
    %42 = arith.addf %38, %41 : vector<16x1xf32>
    %43 = math.rsqrt %42 : vector<16x1xf32>
    %44 = vector.broadcast %43 : vector<16x1xf32> to vector<16x32xf32>
    %45 = arith.mulf %40, %44 : vector<16x32xf32>
    %46 = vector.broadcast %26 : vector<1x32xf32> to vector<16x32xf32>
    %47 = arith.mulf %45, %46 : vector<16x32xf32>
    %48 = vector.broadcast %27 : vector<1x32xf32> to vector<16x32xf32>
    %49 = arith.addf %47, %48 : vector<16x32xf32>
    %c0_22 = arith.constant 0 : index
    %c0_23 = arith.constant 0 : index
    %50 = vector.load %arg3[%c0_22, %c0_23] : memref<16x16xf32, #tpu.memory_space<vmem>>, vector<16x16xf32>
    %c0_24 = arith.constant 0 : index
    %c0_25 = arith.constant 0 : index
    %c0_26 = arith.constant 0 : index
    %51 = vector.load %arg9[%c0_24, %c0_25, %c0_26] : memref<2x32x96xf32, #tpu.memory_space<vmem>>, vector<1x32x96xf32>
    %52 = vector.shape_cast %51 : vector<1x32x96xf32> to vector<32x96xf32>
    %cst_27 = arith.constant dense<0.000000e+00> : vector<16x96xf32>
    %53 = tpu.matmul %49, %52, %cst_27 {dimension_numbers = #tpu.dot_dimension_numbers<[1], [0], [0], [1], [0, 0, 1, 1], [], []>} : vector<16x32xf32>, vector<32x96xf32>, vector<16x96xf32> -> vector<16x96xf32>
    %c0_28 = arith.constant 0 : index
    %c0_29 = arith.constant 0 : index
    %c0_30 = arith.constant 0 : index
    %54 = vector.load %arg10[%c0_28, %c0_29, %c0_30] : memref<2x1x96xf32, #tpu.memory_space<vmem>>, vector<1x1x96xf32>
    %55 = vector.shape_cast %54 : vector<1x1x96xf32> to vector<1x96xf32>
    %56 = vector.broadcast %55 : vector<1x96xf32> to vector<16x96xf32>
    %57 = arith.addf %53, %56 : vector<16x96xf32>
    %c0_31 = arith.constant 0 : index
    %c0_32 = arith.constant 0 : index
    %c0_33 = arith.constant 0 : index
    %58 = vector.load %arg11[%c0_31, %c0_32, %c0_33] : memref<2x32x32xf32, #tpu.memory_space<vmem>>, vector<1x32x32xf32>
    %59 = vector.shape_cast %58 : vector<1x32x32xf32> to vector<32x32xf32>
    %c0_34 = arith.constant 0 : index
    %c0_35 = arith.constant 0 : index
    %c0_36 = arith.constant 0 : index
    %60 = vector.load %arg12[%c0_34, %c0_35, %c0_36] : memref<2x1x32xf32, #tpu.memory_space<vmem>>, vector<1x1x32xf32>
    %61 = vector.shape_cast %60 : vector<1x1x32xf32> to vector<1x32xf32>
    %62 = vector.extract_strided_slice %57 {offsets = [0, 0], sizes = [16, 16], strides = [1, 1]} : vector<16x96xf32> to vector<16x16xf32>
    %63 = vector.extract_strided_slice %57 {offsets = [0, 32], sizes = [16, 16], strides = [1, 1]} : vector<16x96xf32> to vector<16x16xf32>
    %64 = vector.extract_strided_slice %57 {offsets = [0, 64], sizes = [16, 16], strides = [1, 1]} : vector<16x96xf32> to vector<16x16xf32>
    %65 = tpu.transpose %63, [1, 0] : vector<16x16xf32> -> vector<16x16xf32>
    %cst_37 = arith.constant dense<0.000000e+00> : vector<16x16xf32>
    %66 = tpu.matmul %62, %65, %cst_37 {dimension_numbers = #tpu.dot_dimension_numbers<[1], [0], [0], [1], [0, 0, 1, 1], [], []>} : vector<16x16xf32>, vector<16x16xf32>, vector<16x16xf32> -> vector<16x16xf32>
    %cst_38 = arith.constant 2.500000e-01 : f32
    %67 = vector.broadcast %cst_38 : f32 to vector<16x16xf32>
    %68 = arith.mulf %66, %67 : vector<16x16xf32>
    %69 = arith.addf %68, %50 : vector<16x16xf32>
    %cst_39 = arith.constant dense<0xFF800000> : vector<16xf32>
    %70 = vector.multi_reduction <maximumf>, %69, %cst_39 [1] : vector<16x16xf32> to vector<16xf32>
    %71 = vector.shape_cast %70 : vector<16xf32> to vector<16x1xf32>
    %72 = vector.broadcast %71 : vector<16x1xf32> to vector<16x16xf32>
    %73 = arith.subf %69, %72 : vector<16x16xf32>
    %74 = math.exp %73 : vector<16x16xf32>
    %cst_40 = arith.constant dense<0.000000e+00> : vector<16xf32>
    %75 = vector.multi_reduction <add>, %74, %cst_40 [1] : vector<16x16xf32> to vector<16xf32>
    %76 = vector.shape_cast %75 : vector<16xf32> to vector<16x1xf32>
    %77 = tpu.reciprocal %76 {approx = true} : vector<16x1xf32> -> vector<16x1xf32>
    %78 = vector.broadcast %77 : vector<16x1xf32> to vector<16x16xf32>
    %79 = arith.mulf %74, %78 : vector<16x16xf32>
    %cst_41 = arith.constant dense<0.000000e+00> : vector<16x16xf32>
    %80 = tpu.matmul %79, %64, %cst_41 {dimension_numbers = #tpu.dot_dimension_numbers<[1], [0], [0], [1], [0, 0, 1, 1], [], []>} : vector<16x16xf32>, vector<16x16xf32>, vector<16x16xf32> -> vector<16x16xf32>
    %81 = vector.extract_strided_slice %59 {offsets = [0, 0], sizes = [16, 32], strides = [1, 1]} : vector<32x32xf32> to vector<16x32xf32>
    %cst_42 = arith.constant dense<0.000000e+00> : vector<16x32xf32>
    %82 = tpu.matmul %80, %81, %cst_42 {dimension_numbers = #tpu.dot_dimension_numbers<[1], [0], [0], [1], [0, 0, 1, 1], [], []>} : vector<16x16xf32>, vector<16x32xf32>, vector<16x32xf32> -> vector<16x32xf32>
    %83 = vector.broadcast %61 : vector<1x32xf32> to vector<16x32xf32>
    %84 = arith.addf %83, %82 : vector<16x32xf32>
    %85 = vector.extract_strided_slice %57 {offsets = [0, 16], sizes = [16, 16], strides = [1, 1]} : vector<16x96xf32> to vector<16x16xf32>
    %86 = vector.extract_strided_slice %57 {offsets = [0, 48], sizes = [16, 16], strides = [1, 1]} : vector<16x96xf32> to vector<16x16xf32>
    %87 = vector.extract_strided_slice %57 {offsets = [0, 80], sizes = [16, 16], strides = [1, 1]} : vector<16x96xf32> to vector<16x16xf32>
    %88 = tpu.transpose %86, [1, 0] : vector<16x16xf32> -> vector<16x16xf32>
    %cst_43 = arith.constant dense<0.000000e+00> : vector<16x16xf32>
    %89 = tpu.matmul %85, %88, %cst_43 {dimension_numbers = #tpu.dot_dimension_numbers<[1], [0], [0], [1], [0, 0, 1, 1], [], []>} : vector<16x16xf32>, vector<16x16xf32>, vector<16x16xf32> -> vector<16x16xf32>
    %cst_44 = arith.constant 2.500000e-01 : f32
    %90 = vector.broadcast %cst_44 : f32 to vector<16x16xf32>
    %91 = arith.mulf %89, %90 : vector<16x16xf32>
    %92 = arith.addf %91, %50 : vector<16x16xf32>
    %cst_45 = arith.constant dense<0xFF800000> : vector<16xf32>
    %93 = vector.multi_reduction <maximumf>, %92, %cst_45 [1] : vector<16x16xf32> to vector<16xf32>
    %94 = vector.shape_cast %93 : vector<16xf32> to vector<16x1xf32>
    %95 = vector.broadcast %94 : vector<16x1xf32> to vector<16x16xf32>
    %96 = arith.subf %92, %95 : vector<16x16xf32>
    %97 = math.exp %96 : vector<16x16xf32>
    %cst_46 = arith.constant dense<0.000000e+00> : vector<16xf32>
    %98 = vector.multi_reduction <add>, %97, %cst_46 [1] : vector<16x16xf32> to vector<16xf32>
    %99 = vector.shape_cast %98 : vector<16xf32> to vector<16x1xf32>
    %100 = tpu.reciprocal %99 {approx = true} : vector<16x1xf32> -> vector<16x1xf32>
    %101 = vector.broadcast %100 : vector<16x1xf32> to vector<16x16xf32>
    %102 = arith.mulf %97, %101 : vector<16x16xf32>
    %cst_47 = arith.constant dense<0.000000e+00> : vector<16x16xf32>
    %103 = tpu.matmul %102, %87, %cst_47 {dimension_numbers = #tpu.dot_dimension_numbers<[1], [0], [0], [1], [0, 0, 1, 1], [], []>} : vector<16x16xf32>, vector<16x16xf32>, vector<16x16xf32> -> vector<16x16xf32>
    %104 = vector.extract_strided_slice %59 {offsets = [16, 0], sizes = [16, 32], strides = [1, 1]} : vector<32x32xf32> to vector<16x32xf32>
    %cst_48 = arith.constant dense<0.000000e+00> : vector<16x32xf32>
    %105 = tpu.matmul %103, %104, %cst_48 {dimension_numbers = #tpu.dot_dimension_numbers<[1], [0], [0], [1], [0, 0, 1, 1], [], []>} : vector<16x16xf32>, vector<16x32xf32>, vector<16x32xf32> -> vector<16x32xf32>
    %106 = arith.addf %84, %105 : vector<16x32xf32>
    %107 = arith.addf %106, %49 : vector<16x32xf32>
    %c0_49 = arith.constant 0 : index
    %c0_50 = arith.constant 0 : index
    %c0_51 = arith.constant 0 : index
    %108 = vector.load %arg13[%c0_49, %c0_50, %c0_51] : memref<2x1x32xf32, #tpu.memory_space<vmem>>, vector<1x1x32xf32>
    %109 = vector.shape_cast %108 : vector<1x1x32xf32> to vector<1x32xf32>
    %c0_52 = arith.constant 0 : index
    %c0_53 = arith.constant 0 : index
    %c0_54 = arith.constant 0 : index
    %110 = vector.load %arg14[%c0_52, %c0_53, %c0_54] : memref<2x1x32xf32, #tpu.memory_space<vmem>>, vector<1x1x32xf32>
    %111 = vector.shape_cast %110 : vector<1x1x32xf32> to vector<1x32xf32>
    %cst_55 = arith.constant dense<0.000000e+00> : vector<16xf32>
    %112 = vector.multi_reduction <add>, %107, %cst_55 [1] : vector<16x32xf32> to vector<16xf32>
    %113 = vector.shape_cast %112 : vector<16xf32> to vector<16x1xf32>
    %cst_56 = arith.constant 3.200000e+01 : f32
    %114 = vector.broadcast %cst_56 : f32 to vector<16x1xf32>
    %115 = arith.divf %113, %114 : vector<16x1xf32>
    %116 = vector.broadcast %115 : vector<16x1xf32> to vector<16x32xf32>
    %117 = arith.subf %107, %116 : vector<16x32xf32>
    %118 = arith.mulf %117, %117 : vector<16x32xf32>
    %cst_57 = arith.constant dense<0.000000e+00> : vector<16xf32>
    %119 = vector.multi_reduction <add>, %118, %cst_57 [1] : vector<16x32xf32> to vector<16xf32>
    %120 = vector.shape_cast %119 : vector<16xf32> to vector<16x1xf32>
    %cst_58 = arith.constant 3.200000e+01 : f32
    %121 = vector.broadcast %cst_58 : f32 to vector<16x1xf32>
    %122 = arith.divf %120, %121 : vector<16x1xf32>
    %123 = vector.broadcast %115 : vector<16x1xf32> to vector<16x32xf32>
    %124 = arith.subf %107, %123 : vector<16x32xf32>
    %cst_59 = arith.constant 9.99999997E-7 : f32
    %125 = vector.broadcast %cst_59 : f32 to vector<16x1xf32>
    %126 = arith.addf %122, %125 : vector<16x1xf32>
    %127 = math.rsqrt %126 : vector<16x1xf32>
    %128 = vector.broadcast %127 : vector<16x1xf32> to vector<16x32xf32>
    %129 = arith.mulf %124, %128 : vector<16x32xf32>
    %130 = vector.broadcast %109 : vector<1x32xf32> to vector<16x32xf32>
    %131 = arith.mulf %129, %130 : vector<16x32xf32>
    %132 = vector.broadcast %111 : vector<1x32xf32> to vector<16x32xf32>
    %133 = arith.addf %131, %132 : vector<16x32xf32>
    %c0_60 = arith.constant 0 : index
    %c0_61 = arith.constant 0 : index
    %c0_62 = arith.constant 0 : index
    %134 = vector.load %arg15[%c0_60, %c0_61, %c0_62] : memref<2x32x64xf32, #tpu.memory_space<vmem>>, vector<1x32x64xf32>
    %135 = vector.shape_cast %134 : vector<1x32x64xf32> to vector<32x64xf32>
    %cst_63 = arith.constant dense<0.000000e+00> : vector<16x64xf32>
    %136 = tpu.matmul %133, %135, %cst_63 {dimension_numbers = #tpu.dot_dimension_numbers<[1], [0], [0], [1], [0, 0, 1, 1], [], []>} : vector<16x32xf32>, vector<32x64xf32>, vector<16x64xf32> -> vector<16x64xf32>
    %c0_64 = arith.constant 0 : index
    %c0_65 = arith.constant 0 : index
    %c0_66 = arith.constant 0 : index
    %137 = vector.load %arg16[%c0_64, %c0_65, %c0_66] : memref<2x1x64xf32, #tpu.memory_space<vmem>>, vector<1x1x64xf32>
    %138 = vector.shape_cast %137 : vector<1x1x64xf32> to vector<1x64xf32>
    %139 = vector.broadcast %138 : vector<1x64xf32> to vector<16x64xf32>
    %140 = arith.addf %136, %139 : vector<16x64xf32>
    %cst_67 = arith.constant 5.000000e-01 : f32
    %141 = vector.broadcast %cst_67 : f32 to vector<16x64xf32>
    %142 = arith.mulf %141, %140 : vector<16x64xf32>
    %cst_68 = arith.constant 0.707106769 : f32
    %143 = vector.broadcast %cst_68 : f32 to vector<16x64xf32>
    %144 = arith.mulf %140, %143 : vector<16x64xf32>
    %145 = math.erf %144 : vector<16x64xf32>
    %cst_69 = arith.constant 1.000000e+00 : f32
    %146 = vector.broadcast %cst_69 : f32 to vector<16x64xf32>
    %147 = arith.addf %146, %145 : vector<16x64xf32>
    %148 = arith.mulf %142, %147 : vector<16x64xf32>
    %c0_70 = arith.constant 0 : index
    %c0_71 = arith.constant 0 : index
    %c0_72 = arith.constant 0 : index
    %149 = vector.load %arg17[%c0_70, %c0_71, %c0_72] : memref<2x64x32xf32, #tpu.memory_space<vmem>>, vector<1x64x32xf32>
    %150 = vector.shape_cast %149 : vector<1x64x32xf32> to vector<64x32xf32>
    %cst_73 = arith.constant dense<0.000000e+00> : vector<16x32xf32>
    %151 = tpu.matmul %148, %150, %cst_73 {dimension_numbers = #tpu.dot_dimension_numbers<[1], [0], [0], [1], [0, 0, 1, 1], [], []>} : vector<16x64xf32>, vector<64x32xf32>, vector<16x32xf32> -> vector<16x32xf32>
    %c0_74 = arith.constant 0 : index
    %c0_75 = arith.constant 0 : index
    %c0_76 = arith.constant 0 : index
    %152 = vector.load %arg18[%c0_74, %c0_75, %c0_76] : memref<2x1x32xf32, #tpu.memory_space<vmem>>, vector<1x1x32xf32>
    %153 = vector.shape_cast %152 : vector<1x1x32xf32> to vector<1x32xf32>
    %154 = vector.broadcast %153 : vector<1x32xf32> to vector<16x32xf32>
    %155 = arith.addf %151, %154 : vector<16x32xf32>
    %156 = arith.addf %155, %133 : vector<16x32xf32>
    %c0_77 = arith.constant 0 : index
    %c0_78 = arith.constant 0 : index
    %c0_79 = arith.constant 0 : index
    %157 = vector.load %arg19[%c0_77, %c0_78, %c0_79] : memref<2x1x32xf32, #tpu.memory_space<vmem>>, vector<1x1x32xf32>
    %158 = vector.shape_cast %157 : vector<1x1x32xf32> to vector<1x32xf32>
    %c0_80 = arith.constant 0 : index
    %c0_81 = arith.constant 0 : index
    %c0_82 = arith.constant 0 : index
    %159 = vector.load %arg20[%c0_80, %c0_81, %c0_82] : memref<2x1x32xf32, #tpu.memory_space<vmem>>, vector<1x1x32xf32>
    %160 = vector.shape_cast %159 : vector<1x1x32xf32> to vector<1x32xf32>
    %cst_83 = arith.constant dense<0.000000e+00> : vector<16xf32>
    %161 = vector.multi_reduction <add>, %156, %cst_83 [1] : vector<16x32xf32> to vector<16xf32>
    %162 = vector.shape_cast %161 : vector<16xf32> to vector<16x1xf32>
    %cst_84 = arith.constant 3.200000e+01 : f32
    %163 = vector.broadcast %cst_84 : f32 to vector<16x1xf32>
    %164 = arith.divf %162, %163 : vector<16x1xf32>
    %165 = vector.broadcast %164 : vector<16x1xf32> to vector<16x32xf32>
    %166 = arith.subf %156, %165 : vector<16x32xf32>
    %167 = arith.mulf %166, %166 : vector<16x32xf32>
    %cst_85 = arith.constant dense<0.000000e+00> : vector<16xf32>
    %168 = vector.multi_reduction <add>, %167, %cst_85 [1] : vector<16x32xf32> to vector<16xf32>
    %169 = vector.shape_cast %168 : vector<16xf32> to vector<16x1xf32>
    %cst_86 = arith.constant 3.200000e+01 : f32
    %170 = vector.broadcast %cst_86 : f32 to vector<16x1xf32>
    %171 = arith.divf %169, %170 : vector<16x1xf32>
    %172 = vector.broadcast %164 : vector<16x1xf32> to vector<16x32xf32>
    %173 = arith.subf %156, %172 : vector<16x32xf32>
    %cst_87 = arith.constant 9.99999997E-7 : f32
    %174 = vector.broadcast %cst_87 : f32 to vector<16x1xf32>
    %175 = arith.addf %171, %174 : vector<16x1xf32>
    %176 = math.rsqrt %175 : vector<16x1xf32>
    %177 = vector.broadcast %176 : vector<16x1xf32> to vector<16x32xf32>
    %178 = arith.mulf %173, %177 : vector<16x32xf32>
    %179 = vector.broadcast %158 : vector<1x32xf32> to vector<16x32xf32>
    %180 = arith.mulf %178, %179 : vector<16x32xf32>
    %181 = vector.broadcast %160 : vector<1x32xf32> to vector<16x32xf32>
    %182 = arith.addf %180, %181 : vector<16x32xf32>
    %c1 = arith.constant 1 : index
    %c0_88 = arith.constant 0 : index
    %c0_89 = arith.constant 0 : index
    %183 = vector.load %arg9[%c1, %c0_88, %c0_89] : memref<2x32x96xf32, #tpu.memory_space<vmem>>, vector<1x32x96xf32>
    %184 = vector.shape_cast %183 : vector<1x32x96xf32> to vector<32x96xf32>
    %cst_90 = arith.constant dense<0.000000e+00> : vector<16x96xf32>
    %185 = tpu.matmul %182, %184, %cst_90 {dimension_numbers = #tpu.dot_dimension_numbers<[1], [0], [0], [1], [0, 0, 1, 1], [], []>} : vector<16x32xf32>, vector<32x96xf32>, vector<16x96xf32> -> vector<16x96xf32>
    %c1_91 = arith.constant 1 : index
    %c0_92 = arith.constant 0 : index
    %c0_93 = arith.constant 0 : index
    %186 = vector.load %arg10[%c1_91, %c0_92, %c0_93] : memref<2x1x96xf32, #tpu.memory_space<vmem>>, vector<1x1x96xf32>
    %187 = vector.shape_cast %186 : vector<1x1x96xf32> to vector<1x96xf32>
    %188 = vector.broadcast %187 : vector<1x96xf32> to vector<16x96xf32>
    %189 = arith.addf %185, %188 : vector<16x96xf32>
    %c1_94 = arith.constant 1 : index
    %c0_95 = arith.constant 0 : index
    %c0_96 = arith.constant 0 : index
    %190 = vector.load %arg11[%c1_94, %c0_95, %c0_96] : memref<2x32x32xf32, #tpu.memory_space<vmem>>, vector<1x32x32xf32>
    %191 = vector.shape_cast %190 : vector<1x32x32xf32> to vector<32x32xf32>
    %c1_97 = arith.constant 1 : index
    %c0_98 = arith.constant 0 : index
    %c0_99 = arith.constant 0 : index
    %192 = vector.load %arg12[%c1_97, %c0_98, %c0_99] : memref<2x1x32xf32, #tpu.memory_space<vmem>>, vector<1x1x32xf32>
    %193 = vector.shape_cast %192 : vector<1x1x32xf32> to vector<1x32xf32>
    %194 = vector.extract_strided_slice %189 {offsets = [0, 0], sizes = [16, 16], strides = [1, 1]} : vector<16x96xf32> to vector<16x16xf32>
    %195 = vector.extract_strided_slice %189 {offsets = [0, 32], sizes = [16, 16], strides = [1, 1]} : vector<16x96xf32> to vector<16x16xf32>
    %196 = vector.extract_strided_slice %189 {offsets = [0, 64], sizes = [16, 16], strides = [1, 1]} : vector<16x96xf32> to vector<16x16xf32>
    %197 = tpu.transpose %195, [1, 0] : vector<16x16xf32> -> vector<16x16xf32>
    %cst_100 = arith.constant dense<0.000000e+00> : vector<16x16xf32>
    %198 = tpu.matmul %194, %197, %cst_100 {dimension_numbers = #tpu.dot_dimension_numbers<[1], [0], [0], [1], [0, 0, 1, 1], [], []>} : vector<16x16xf32>, vector<16x16xf32>, vector<16x16xf32> -> vector<16x16xf32>
    %cst_101 = arith.constant 2.500000e-01 : f32
    %199 = vector.broadcast %cst_101 : f32 to vector<16x16xf32>
    %200 = arith.mulf %198, %199 : vector<16x16xf32>
    %201 = arith.addf %200, %50 : vector<16x16xf32>
    %cst_102 = arith.constant dense<0xFF800000> : vector<16xf32>
    %202 = vector.multi_reduction <maximumf>, %201, %cst_102 [1] : vector<16x16xf32> to vector<16xf32>
    %203 = vector.shape_cast %202 : vector<16xf32> to vector<16x1xf32>
    %204 = vector.broadcast %203 : vector<16x1xf32> to vector<16x16xf32>
    %205 = arith.subf %201, %204 : vector<16x16xf32>
    %206 = math.exp %205 : vector<16x16xf32>
    %cst_103 = arith.constant dense<0.000000e+00> : vector<16xf32>
    %207 = vector.multi_reduction <add>, %206, %cst_103 [1] : vector<16x16xf32> to vector<16xf32>
    %208 = vector.shape_cast %207 : vector<16xf32> to vector<16x1xf32>
    %209 = tpu.reciprocal %208 {approx = true} : vector<16x1xf32> -> vector<16x1xf32>
    %210 = vector.broadcast %209 : vector<16x1xf32> to vector<16x16xf32>
    %211 = arith.mulf %206, %210 : vector<16x16xf32>
    %cst_104 = arith.constant dense<0.000000e+00> : vector<16x16xf32>
    %212 = tpu.matmul %211, %196, %cst_104 {dimension_numbers = #tpu.dot_dimension_numbers<[1], [0], [0], [1], [0, 0, 1, 1], [], []>} : vector<16x16xf32>, vector<16x16xf32>, vector<16x16xf32> -> vector<16x16xf32>
    %213 = vector.extract_strided_slice %191 {offsets = [0, 0], sizes = [16, 32], strides = [1, 1]} : vector<32x32xf32> to vector<16x32xf32>
    %cst_105 = arith.constant dense<0.000000e+00> : vector<16x32xf32>
    %214 = tpu.matmul %212, %213, %cst_105 {dimension_numbers = #tpu.dot_dimension_numbers<[1], [0], [0], [1], [0, 0, 1, 1], [], []>} : vector<16x16xf32>, vector<16x32xf32>, vector<16x32xf32> -> vector<16x32xf32>
    %215 = vector.broadcast %193 : vector<1x32xf32> to vector<16x32xf32>
    %216 = arith.addf %215, %214 : vector<16x32xf32>
    %217 = vector.extract_strided_slice %189 {offsets = [0, 16], sizes = [16, 16], strides = [1, 1]} : vector<16x96xf32> to vector<16x16xf32>
    %218 = vector.extract_strided_slice %189 {offsets = [0, 48], sizes = [16, 16], strides = [1, 1]} : vector<16x96xf32> to vector<16x16xf32>
    %219 = vector.extract_strided_slice %189 {offsets = [0, 80], sizes = [16, 16], strides = [1, 1]} : vector<16x96xf32> to vector<16x16xf32>
    %220 = tpu.transpose %218, [1, 0] : vector<16x16xf32> -> vector<16x16xf32>
    %cst_106 = arith.constant dense<0.000000e+00> : vector<16x16xf32>
    %221 = tpu.matmul %217, %220, %cst_106 {dimension_numbers = #tpu.dot_dimension_numbers<[1], [0], [0], [1], [0, 0, 1, 1], [], []>} : vector<16x16xf32>, vector<16x16xf32>, vector<16x16xf32> -> vector<16x16xf32>
    %cst_107 = arith.constant 2.500000e-01 : f32
    %222 = vector.broadcast %cst_107 : f32 to vector<16x16xf32>
    %223 = arith.mulf %221, %222 : vector<16x16xf32>
    %224 = arith.addf %223, %50 : vector<16x16xf32>
    %cst_108 = arith.constant dense<0xFF800000> : vector<16xf32>
    %225 = vector.multi_reduction <maximumf>, %224, %cst_108 [1] : vector<16x16xf32> to vector<16xf32>
    %226 = vector.shape_cast %225 : vector<16xf32> to vector<16x1xf32>
    %227 = vector.broadcast %226 : vector<16x1xf32> to vector<16x16xf32>
    %228 = arith.subf %224, %227 : vector<16x16xf32>
    %229 = math.exp %228 : vector<16x16xf32>
    %cst_109 = arith.constant dense<0.000000e+00> : vector<16xf32>
    %230 = vector.multi_reduction <add>, %229, %cst_109 [1] : vector<16x16xf32> to vector<16xf32>
    %231 = vector.shape_cast %230 : vector<16xf32> to vector<16x1xf32>
    %232 = tpu.reciprocal %231 {approx = true} : vector<16x1xf32> -> vector<16x1xf32>
    %233 = vector.broadcast %232 : vector<16x1xf32> to vector<16x16xf32>
    %234 = arith.mulf %229, %233 : vector<16x16xf32>
    %cst_110 = arith.constant dense<0.000000e+00> : vector<16x16xf32>
    %235 = tpu.matmul %234, %219, %cst_110 {dimension_numbers = #tpu.dot_dimension_numbers<[1], [0], [0], [1], [0, 0, 1, 1], [], []>} : vector<16x16xf32>, vector<16x16xf32>, vector<16x16xf32> -> vector<16x16xf32>
    %236 = vector.extract_strided_slice %191 {offsets = [16, 0], sizes = [16, 32], strides = [1, 1]} : vector<32x32xf32> to vector<16x32xf32>
    %cst_111 = arith.constant dense<0.000000e+00> : vector<16x32xf32>
    %237 = tpu.matmul %235, %236, %cst_111 {dimension_numbers = #tpu.dot_dimension_numbers<[1], [0], [0], [1], [0, 0, 1, 1], [], []>} : vector<16x16xf32>, vector<16x32xf32>, vector<16x32xf32> -> vector<16x32xf32>
    %238 = arith.addf %216, %237 : vector<16x32xf32>
    %239 = arith.addf %238, %182 : vector<16x32xf32>
    %c1_112 = arith.constant 1 : index
    %c0_113 = arith.constant 0 : index
    %c0_114 = arith.constant 0 : index
    %240 = vector.load %arg13[%c1_112, %c0_113, %c0_114] : memref<2x1x32xf32, #tpu.memory_space<vmem>>, vector<1x1x32xf32>
    %241 = vector.shape_cast %240 : vector<1x1x32xf32> to vector<1x32xf32>
    %c1_115 = arith.constant 1 : index
    %c0_116 = arith.constant 0 : index
    %c0_117 = arith.constant 0 : index
    %242 = vector.load %arg14[%c1_115, %c0_116, %c0_117] : memref<2x1x32xf32, #tpu.memory_space<vmem>>, vector<1x1x32xf32>
    %243 = vector.shape_cast %242 : vector<1x1x32xf32> to vector<1x32xf32>
    %cst_118 = arith.constant dense<0.000000e+00> : vector<16xf32>
    %244 = vector.multi_reduction <add>, %239, %cst_118 [1] : vector<16x32xf32> to vector<16xf32>
    %245 = vector.shape_cast %244 : vector<16xf32> to vector<16x1xf32>
    %cst_119 = arith.constant 3.200000e+01 : f32
    %246 = vector.broadcast %cst_119 : f32 to vector<16x1xf32>
    %247 = arith.divf %245, %246 : vector<16x1xf32>
    %248 = vector.broadcast %247 : vector<16x1xf32> to vector<16x32xf32>
    %249 = arith.subf %239, %248 : vector<16x32xf32>
    %250 = arith.mulf %249, %249 : vector<16x32xf32>
    %cst_120 = arith.constant dense<0.000000e+00> : vector<16xf32>
    %251 = vector.multi_reduction <add>, %250, %cst_120 [1] : vector<16x32xf32> to vector<16xf32>
    %252 = vector.shape_cast %251 : vector<16xf32> to vector<16x1xf32>
    %cst_121 = arith.constant 3.200000e+01 : f32
    %253 = vector.broadcast %cst_121 : f32 to vector<16x1xf32>
    %254 = arith.divf %252, %253 : vector<16x1xf32>
    %255 = vector.broadcast %247 : vector<16x1xf32> to vector<16x32xf32>
    %256 = arith.subf %239, %255 : vector<16x32xf32>
    %cst_122 = arith.constant 9.99999997E-7 : f32
    %257 = vector.broadcast %cst_122 : f32 to vector<16x1xf32>
    %258 = arith.addf %254, %257 : vector<16x1xf32>
    %259 = math.rsqrt %258 : vector<16x1xf32>
    %260 = vector.broadcast %259 : vector<16x1xf32> to vector<16x32xf32>
    %261 = arith.mulf %256, %260 : vector<16x32xf32>
    %262 = vector.broadcast %241 : vector<1x32xf32> to vector<16x32xf32>
    %263 = arith.mulf %261, %262 : vector<16x32xf32>
    %264 = vector.broadcast %243 : vector<1x32xf32> to vector<16x32xf32>
    %265 = arith.addf %263, %264 : vector<16x32xf32>
    %c1_123 = arith.constant 1 : index
    %c0_124 = arith.constant 0 : index
    %c0_125 = arith.constant 0 : index
    %266 = vector.load %arg15[%c1_123, %c0_124, %c0_125] : memref<2x32x64xf32, #tpu.memory_space<vmem>>, vector<1x32x64xf32>
    %267 = vector.shape_cast %266 : vector<1x32x64xf32> to vector<32x64xf32>
    %cst_126 = arith.constant dense<0.000000e+00> : vector<16x64xf32>
    %268 = tpu.matmul %265, %267, %cst_126 {dimension_numbers = #tpu.dot_dimension_numbers<[1], [0], [0], [1], [0, 0, 1, 1], [], []>} : vector<16x32xf32>, vector<32x64xf32>, vector<16x64xf32> -> vector<16x64xf32>
    %c1_127 = arith.constant 1 : index
    %c0_128 = arith.constant 0 : index
    %c0_129 = arith.constant 0 : index
    %269 = vector.load %arg16[%c1_127, %c0_128, %c0_129] : memref<2x1x64xf32, #tpu.memory_space<vmem>>, vector<1x1x64xf32>
    %270 = vector.shape_cast %269 : vector<1x1x64xf32> to vector<1x64xf32>
    %271 = vector.broadcast %270 : vector<1x64xf32> to vector<16x64xf32>
    %272 = arith.addf %268, %271 : vector<16x64xf32>
    %cst_130 = arith.constant 5.000000e-01 : f32
    %273 = vector.broadcast %cst_130 : f32 to vector<16x64xf32>
    %274 = arith.mulf %273, %272 : vector<16x64xf32>
    %cst_131 = arith.constant 0.707106769 : f32
    %275 = vector.broadcast %cst_131 : f32 to vector<16x64xf32>
    %276 = arith.mulf %272, %275 : vector<16x64xf32>
    %277 = math.erf %276 : vector<16x64xf32>
    %cst_132 = arith.constant 1.000000e+00 : f32
    %278 = vector.broadcast %cst_132 : f32 to vector<16x64xf32>
    %279 = arith.addf %278, %277 : vector<16x64xf32>
    %280 = arith.mulf %274, %279 : vector<16x64xf32>
    %c1_133 = arith.constant 1 : index
    %c0_134 = arith.constant 0 : index
    %c0_135 = arith.constant 0 : index
    %281 = vector.load %arg17[%c1_133, %c0_134, %c0_135] : memref<2x64x32xf32, #tpu.memory_space<vmem>>, vector<1x64x32xf32>
    %282 = vector.shape_cast %281 : vector<1x64x32xf32> to vector<64x32xf32>
    %cst_136 = arith.constant dense<0.000000e+00> : vector<16x32xf32>
    %283 = tpu.matmul %280, %282, %cst_136 {dimension_numbers = #tpu.dot_dimension_numbers<[1], [0], [0], [1], [0, 0, 1, 1], [], []>} : vector<16x64xf32>, vector<64x32xf32>, vector<16x32xf32> -> vector<16x32xf32>
    %c1_137 = arith.constant 1 : index
    %c0_138 = arith.constant 0 : index
    %c0_139 = arith.constant 0 : index
    %284 = vector.load %arg18[%c1_137, %c0_138, %c0_139] : memref<2x1x32xf32, #tpu.memory_space<vmem>>, vector<1x1x32xf32>
    %285 = vector.shape_cast %284 : vector<1x1x32xf32> to vector<1x32xf32>
    %286 = vector.broadcast %285 : vector<1x32xf32> to vector<16x32xf32>
    %287 = arith.addf %283, %286 : vector<16x32xf32>
    %288 = arith.addf %287, %265 : vector<16x32xf32>
    %c1_140 = arith.constant 1 : index
    %c0_141 = arith.constant 0 : index
    %c0_142 = arith.constant 0 : index
    %289 = vector.load %arg19[%c1_140, %c0_141, %c0_142] : memref<2x1x32xf32, #tpu.memory_space<vmem>>, vector<1x1x32xf32>
    %290 = vector.shape_cast %289 : vector<1x1x32xf32> to vector<1x32xf32>
    %c1_143 = arith.constant 1 : index
    %c0_144 = arith.constant 0 : index
    %c0_145 = arith.constant 0 : index
    %291 = vector.load %arg20[%c1_143, %c0_144, %c0_145] : memref<2x1x32xf32, #tpu.memory_space<vmem>>, vector<1x1x32xf32>
    %292 = vector.shape_cast %291 : vector<1x1x32xf32> to vector<1x32xf32>
    %cst_146 = arith.constant dense<0.000000e+00> : vector<16xf32>
    %293 = vector.multi_reduction <add>, %288, %cst_146 [1] : vector<16x32xf32> to vector<16xf32>
    %294 = vector.shape_cast %293 : vector<16xf32> to vector<16x1xf32>
    %cst_147 = arith.constant 3.200000e+01 : f32
    %295 = vector.broadcast %cst_147 : f32 to vector<16x1xf32>
    %296 = arith.divf %294, %295 : vector<16x1xf32>
    %297 = vector.broadcast %296 : vector<16x1xf32> to vector<16x32xf32>
    %298 = arith.subf %288, %297 : vector<16x32xf32>
    %299 = arith.mulf %298, %298 : vector<16x32xf32>
    %cst_148 = arith.constant dense<0.000000e+00> : vector<16xf32>
    %300 = vector.multi_reduction <add>, %299, %cst_148 [1] : vector<16x32xf32> to vector<16xf32>
    %301 = vector.shape_cast %300 : vector<16xf32> to vector<16x1xf32>
    %cst_149 = arith.constant 3.200000e+01 : f32
    %302 = vector.broadcast %cst_149 : f32 to vector<16x1xf32>
    %303 = arith.divf %301, %302 : vector<16x1xf32>
    %304 = vector.broadcast %296 : vector<16x1xf32> to vector<16x32xf32>
    %305 = arith.subf %288, %304 : vector<16x32xf32>
    %cst_150 = arith.constant 9.99999997E-7 : f32
    %306 = vector.broadcast %cst_150 : f32 to vector<16x1xf32>
    %307 = arith.addf %303, %306 : vector<16x1xf32>
    %308 = math.rsqrt %307 : vector<16x1xf32>
    %309 = vector.broadcast %308 : vector<16x1xf32> to vector<16x32xf32>
    %310 = arith.mulf %305, %309 : vector<16x32xf32>
    %311 = vector.broadcast %290 : vector<1x32xf32> to vector<16x32xf32>
    %312 = arith.mulf %310, %311 : vector<16x32xf32>
    %313 = vector.broadcast %292 : vector<1x32xf32> to vector<16x32xf32>
    %314 = arith.addf %312, %313 : vector<16x32xf32>
    %c0_151 = arith.constant 0 : index
    %c0_152 = arith.constant 0 : index
    %315 = vector.load %arg21[%c0_151, %c0_152] : memref<16x32xf32, #tpu.memory_space<vmem>>, vector<16x32xf32>
    tpu.vector_store %arg21[%c0_151, %c0_152], %314 {strides = array<i32>} : memref<16x32xf32, #tpu.memory_space<vmem>>, vector<16x32xf32>,
    return
  }
}

</mosaic_0001>

<llo_original>
// kernel: tile.0
$region0: #{tile.0}
  %s0 = inlined_call_operand.vmem [shape: s32[2,8], index: 0, kind: input, shape index: {}]
  %s1 = inlined_call_operand.vmem [shape: s32[16,1], index: 1, kind: output, shape index: {}]
  $region1: #{tile.0} parent=0
    #allocation0 [shape = 'u8[4096]{0}', space=vmem, size = 0x1000, scoped, tag = 'scoped mem for input reshape']
    %s3 = sshll.u32 1, 2
    %s4 = ssub.s32 %s3, 1
    %v5 = vld [vmem:[%s0] sm:%s4]
    %6 = vst [vmem:[#allocation0] sm:%s4] %v5
    %v7 = vld [vmem:[#allocation0] sm:$0x3]
    %vm8 = vcmask 7168
    %9 = vst.msk [vmem:[%s1] ss:$8 sm:$0x3] %vm8, %v7
    %v10 = vld [vmem:[#allocation0] sm:$0x3]
    %11 = vrot.lane.b32.xlu0 %v10, 127
    %v12 = vpop.permute.xlu0 %11
    %vm13 = vcmask 7168
    %s14 = scalar_lea.vmem %s1, 1
    %15 = vst.msk [vmem:[%s14] ss:$8 sm:$0x3] %vm13, %v12
    %v16 = vld [vmem:[#allocation0] sm:$0x3]
    %17 = vrot.lane.b32.xlu0 %v16, 126
    %v18 = vpop.permute.xlu0 %17
    %vm19 = vcmask 7168
    %s20 = scalar_lea.vmem %s1, 2
    %21 = vst.msk [vmem:[%s20] ss:$8 sm:$0x3] %vm19, %v18
    %v22 = vld [vmem:[#allocation0] sm:$0x3]
    %23 = vrot.lane.b32.xlu0 %v22, 125
    %v24 = vpop.permute.xlu0 %23
    %vm25 = vcmask 7168
    %s26 = scalar_lea.vmem %s1, 3
    %27 = vst.msk [vmem:[%s26] ss:$8 sm:$0x3] %vm25, %v24
    %v28 = vld [vmem:[#allocation0] sm:$0x3]
    %29 = vrot.lane.b32.xlu0 %v28, 124
    %v30 = vpop.permute.xlu0 %29
    %vm31 = vcmask 7168
    %s32 = scalar_lea.vmem %s1, 4
    %33 = vst.msk [vmem:[%s32] ss:$8 sm:$0x3] %vm31, %v30
    %v34 = vld [vmem:[#allocation0] sm:$0x3]
    %35 = vrot.lane.b32.xlu0 %v34, 123
    %v36 = vpop.permute.xlu0 %35
    %vm37 = vcmask 7168
    %s38 = scalar_lea.vmem %s1, 5
    %39 = vst.msk [vmem:[%s38] ss:$8 sm:$0x3] %vm37, %v36
    %v40 = vld [vmem:[#allocation0] sm:$0x3]
    %41 = vrot.lane.b32.xlu0 %v40, 122
    %v42 = vpop.permute.xlu0 %41
    %vm43 = vcmask 7168
    %s44 = scalar_lea.vmem %s1, 6
    %45 = vst.msk [vmem:[%s44] ss:$8 sm:$0x3] %vm43, %v42
    %v46 = vld [vmem:[#allocation0] sm:$0x3]
    %47 = vrot.lane.b32.xlu0 %v46, 121
    %v48 = vpop.permute.xlu0 %47
    %vm49 = vcmask 7168
    %s50 = scalar_lea.vmem %s1, 7
    %51 = vst.msk [vmem:[%s50] ss:$8 sm:$0x3] %vm49, %v48

// kernel: sequence_encoder.1
$region0: #{sequence_encoder.1}
  #allocation0 [shape = 'u32[]', space=smem, size = 0x4, offset = 0x4, fixed_abs, tag = 'smem constant byte address 0x4 - core index']
  #allocation1 [shape = 'u32[144,128]{1,0:T(1,128)}', space=vmem, size = 0x12000, scoped, tag = 'internal scratch']
  %s0 = inlined_call_operand.vmem [shape: s32[16,1], index: 0, kind: input, shape index: {}]
  %s1 = inlined_call_operand.vmem [shape: s32[16,1], index: 1, kind: input, shape index: {}]
  %s2 = inlined_call_operand.vmem [shape: s32[16,1], index: 2, kind: input, shape index: {}]
  %s3 = inlined_call_operand.vmem [shape: f32[16,16], index: 3, kind: input, shape index: {}]
  %s4 = inlined_call_operand.vmem [shape: f32[64,32], index: 4, kind: input, shape index: {}]
  %s5 = inlined_call_operand.vmem [shape: f32[8,32], index: 5, kind: input, shape index: {}]
  %s6 = inlined_call_operand.vmem [shape: f32[8,32], index: 6, kind: input, shape index: {}]
  %s7 = inlined_call_operand.vmem [shape: f32[1,32], index: 7, kind: input, shape index: {}]
  %s8 = inlined_call_operand.vmem [shape: f32[1,32], index: 8, kind: input, shape index: {}]
  %s9 = inlined_call_operand.vmem [shape: f32[2,32,96], index: 9, kind: input, shape index: {}]
  %s10 = inlined_call_operand.vmem [shape: f32[2,1,96], index: 10, kind: input, shape index: {}]
  %s11 = inlined_call_operand.vmem [shape: f32[2,32,32], index: 11, kind: input, shape index: {}]
  %s12 = inlined_call_operand.vmem [shape: f32[2,1,32], index: 12, kind: input, shape index: {}]
  %s13 = inlined_call_operand.vmem [shape: f32[2,1,32], index: 13, kind: input, shape index: {}]
  %s14 = inlined_call_operand.vmem [shape: f32[2,1,32], index: 14, kind: input, shape index: {}]
  %s15 = inlined_call_operand.vmem [shape: f32[2,32,64], index: 15, kind: input, shape index: {}]
  %s16 = inlined_call_operand.vmem [shape: f32[2,1,64], index: 16, kind: input, shape index: {}]
  %s17 = inlined_call_operand.vmem [shape: f32[2,64,32], index: 17, kind: input, shape index: {}]
  %s18 = inlined_call_operand.vmem [shape: f32[2,1,32], index: 18, kind: input, shape index: {}]
  %s19 = inlined_call_operand.vmem [shape: f32[2,1,32], index: 19, kind: input, shape index: {}]
  %s20 = inlined_call_operand.vmem [shape: f32[2,1,32], index: 20, kind: input, shape index: {}]
  %s21 = inlined_call_operand.hbm [shape: f32[16,32], index: 21, kind: output, shape index: {}]
  %s22 = sld [smem:[#allocation0]]
  $region94: #{sequence_encoder.1} parent=0
    _
  %s24 = ssub.s32 1, %s22
  %s25 = scalar_select 0, %s24, %s22
  $region1: #{sequence_encoder.1} parent=0
    #allocation2 [shape = 'u8[8192]{0}', space=vmem, size = 0x2000, scoped, tag = 'output window, operand 0, single buffered']
    #allocation3 [shape = 's32[1]{0}', space=sflag, size = 0x4, scoped, tag = 'scoped memory for sequence_encoder.1']
    %26 = vsyncpa [#allocation3], 0
    // Predicated region
    $region2: #{sequence_encoder.1} parent=1 // pred_check
      _
    $region3: #{sequence_encoder.1} parent=1 // pred_check_branch
      %28 = sbr.rel (0) target = $region5
    $region4: #{sequence_encoder.1} parent=1 // pred_region
      _
    $region5: #{sequence_encoder.1} parent=1 // pred_fallthru
      _
    // Predicated region
    $region6: #{sequence_encoder.1} parent=1 // pred_check
      _
    $region7: #{sequence_encoder.1} parent=1 // pred_check_branch
      %30 = sbr.rel (0) target = $region9
    $region8: #{sequence_encoder.1} parent=1 // pred_region
      _
    $region9: #{sequence_encoder.1} parent=1 // pred_fallthru
      _
    // Predicated region
    $region10: #{sequence_encoder.1} parent=1 // pred_check
      _
    $region11: #{sequence_encoder.1} parent=1 // pred_check_branch
      %32 = sbr.rel (0) target = $region13
    $region12: #{sequence_encoder.1} parent=1 // pred_region
      _
    $region13: #{sequence_encoder.1} parent=1 // pred_fallthru
      _
    // Predicated region
    $region14: #{sequence_encoder.1} parent=1 // pred_check
      _
    $region15: #{sequence_encoder.1} parent=1 // pred_check_branch
      %34 = sbr.rel (0) target = $region17
    $region16: #{sequence_encoder.1} parent=1 // pred_region
      _
    $region17: #{sequence_encoder.1} parent=1 // pred_fallthru
      _
    // Predicated region
    $region18: #{sequence_encoder.1} parent=1 // pred_check
      _
    $region19: #{sequence_encoder.1} parent=1 // pred_check_branch
      %36 = sbr.rel (0) target = $region21
    $region20: #{sequence_encoder.1} parent=1 // pred_region
      _
    $region21: #{sequence_encoder.1} parent=1 // pred_fallthru
      _
    // Predicated region
    $region22: #{sequence_encoder.1} parent=1 // pred_check
      _
    $region23: #{sequence_encoder.1} parent=1 // pred_check_branch
      %38 = sbr.rel (0) target = $region25
    $region24: #{sequence_encoder.1} parent=1 // pred_region
      _
    $region25: #{sequence_encoder.1} parent=1 // pred_fallthru
      _
    // Predicated region
    $region26: #{sequence_encoder.1} parent=1 // pred_check
      _
    $region27: #{sequence_encoder.1} parent=1 // pred_check_branch
      %40 = sbr.rel (0) target = $region29
    $region28: #{sequence_encoder.1} parent=1 // pred_region
      _
    $region29: #{sequence_encoder.1} parent=1 // pred_fallthru
      _
    // Predicated region
    $region30: #{sequence_encoder.1} parent=1 // pred_check
      _
    $region31: #{sequence_encoder.1} parent=1 // pred_check_branch
      %42 = sbr.rel (0) target = $region33
    $region32: #{sequence_encoder.1} parent=1 // pred_region
      _
    $region33: #{sequence_encoder.1} parent=1 // pred_fallthru
      _
    // Predicated region
    $region34: #{sequence_encoder.1} parent=1 // pred_check
      _
    $region35: #{sequence_encoder.1} parent=1 // pred_check_branch
      %44 = sbr.rel (0) target = $region37
    $region36: #{sequence_encoder.1} parent=1 // pred_region
      _
    $region37: #{sequence_encoder.1} parent=1 // pred_fallthru
      _
    // Predicated region
    $region38: #{sequence_encoder.1} parent=1 // pred_check
      _
    $region39: #{sequence_encoder.1} parent=1 // pred_check_branch
      %46 = sbr.rel (0) target = $region41
    $region40: #{sequence_encoder.1} parent=1 // pred_region
      _
    $region41: #{sequence_encoder.1} parent=1 // pred_fallthru
      _
    // Predicated region
    $region42: #{sequence_encoder.1} parent=1 // pred_check
      _
    $region43: #{sequence_encoder.1} parent=1 // pred_check_branch
      %48 = sbr.rel (0) target = $region45
    $region44: #{sequence_encoder.1} parent=1 // pred_region
      _
    $region45: #{sequence_encoder.1} parent=1 // pred_fallthru
      _
    // Predicated region
    $region46: #{sequence_encoder.1} parent=1 // pred_check
      _
    $region47: #{sequence_encoder.1} parent=1 // pred_check_branch
      %50 = sbr.rel (0) target = $region49
    $region48: #{sequence_encoder.1} parent=1 // pred_region
      _
    $region49: #{sequence_encoder.1} parent=1 // pred_fallthru
      _
    // Predicated region
    $region50: #{sequence_encoder.1} parent=1 // pred_check
      _
    $region51: #{sequence_encoder.1} parent=1 // pred_check_branch
      %52 = sbr.rel (0) target = $region53
    $region52: #{sequence_encoder.1} parent=1 // pred_region
      _
    $region53: #{sequence_encoder.1} parent=1 // pred_fallthru
      _
    // Predicated region
    $region54: #{sequence_encoder.1} parent=1 // pred_check
      _
    $region55: #{sequence_encoder.1} parent=1 // pred_check_branch
      %54 = sbr.rel (0) target = $region57
    $region56: #{sequence_encoder.1} parent=1 // pred_region
      _
    $region57: #{sequence_encoder.1} parent=1 // pred_fallthru
      _
    // Predicated region
    $region58: #{sequence_encoder.1} parent=1 // pred_check
      _
    $region59: #{sequence_encoder.1} parent=1 // pred_check_branch
      %56 = sbr.rel (0) target = $region61
    $region60: #{sequence_encoder.1} parent=1 // pred_region
      _
    $region61: #{sequence_encoder.1} parent=1 // pred_fallthru
      _
    // Predicated region
    $region62: #{sequence_encoder.1} parent=1 // pred_check
      _
    $region63: #{sequence_encoder.1} parent=1 // pred_check_branch
      %58 = sbr.rel (0) target = $region65
    $region64: #{sequence_encoder.1} parent=1 // pred_region
      _
    $region65: #{sequence_encoder.1} parent=1 // pred_fallthru
      _
    // Predicated region
    $region66: #{sequence_encoder.1} parent=1 // pred_check
      _
    $region67: #{sequence_encoder.1} parent=1 // pred_check_branch
      %60 = sbr.rel (0) target = $region69
    $region68: #{sequence_encoder.1} parent=1 // pred_region
      _
    $region69: #{sequence_encoder.1} parent=1 // pred_fallthru
      _
    // Predicated region
    $region70: #{sequence_encoder.1} parent=1 // pred_check
      _
    $region71: #{sequence_encoder.1} parent=1 // pred_check_branch
      %62 = sbr.rel (0) target = $region73
    $region72: #{sequence_encoder.1} parent=1 // pred_region
      _
    $region73: #{sequence_encoder.1} parent=1 // pred_fallthru
      _
    // Predicated region
    $region74: #{sequence_encoder.1} parent=1 // pred_check
      _
    $region75: #{sequence_encoder.1} parent=1 // pred_check_branch
      %64 = sbr.rel (0) target = $region77
    $region76: #{sequence_encoder.1} parent=1 // pred_region
      _
    $region77: #{sequence_encoder.1} parent=1 // pred_fallthru
      _
    // Predicated region
    $region78: #{sequence_encoder.1} parent=1 // pred_check
      _
    $region79: #{sequence_encoder.1} parent=1 // pred_check_branch
      %66 = sbr.rel (0) target = $region81
    $region80: #{sequence_encoder.1} parent=1 // pred_region
      _
    $region81: #{sequence_encoder.1} parent=1 // pred_fallthru
      _
    // Predicated region
    $region82: #{sequence_encoder.1} parent=1 // pred_check
      _
    $region83: #{sequence_encoder.1} parent=1 // pred_check_branch
      %68 = sbr.rel (0) target = $region85
    $region84: #{sequence_encoder.1} parent=1 // pred_region
      _
    $region85: #{sequence_encoder.1} parent=1 // pred_fallthru
      _
    %v69 = vld [vmem:[%s0] sm:$0xff]
    %v70 = vld [vmem:[%s0 + $0x8] sm:$0xff]
    %v71 = vlaneseq
    %v72 = vand.u32 %v71, 127
    %73 = vset.pattern.permute.xlu0 0
    %74 = vperm.xlu0 %73, %v69
    %v75 = vpop.permute.xlu0 %74
    %76 = vset.pattern.permute.xlu0 0
    %77 = vperm.xlu0 %76, %v70
    %v78 = vpop.permute.xlu0 %77
    %vm79 = vcmp.eq.s32.totalorder %v75, %v72
    %vm80 = vcmp.eq.s32.totalorder %v78, %v72
    %v81 = vsel %vm79, 1, 0
    %v82 = vsel %vm80, 1, 0
    %v83 = vcvt.s32.f32 %v81
    %v84 = vcvt.s32.f32 %v82
    %v85 = vld [vmem:[%s4] sm:$0xff]
    %v86 = vld [vmem:[%s4 + $0x8] sm:$0xff]
    %v87 = vld [vmem:[%s4 + $0x10] sm:$0xff]
    %v88 = vld [vmem:[%s4 + $0x18] sm:$0xff]
    %v89 = vld [vmem:[%s4 + $0x20] sm:$0xff]
    %v90 = vld [vmem:[%s4 + $0x28] sm:$0xff]
    %v91 = vld [vmem:[%s4 + $0x30] sm:$0xff]
    %v92 = vld [vmem:[%s4 + $0x38] sm:$0xff]
    %v93 = vld [vmem:[%s2] sm:$0xff]
    %v94 = vld [vmem:[%s2 + $0x8] sm:$0xff]
    %95 = vset.pattern.permute.xlu0 0
    %96 = vperm.xlu0 %95, %v93
    %v97 = vpop.permute.xlu0 %96
    %98 = vset.pattern.permute.xlu0 0
    %99 = vperm.xlu0 %98, %v94
    %v100 = vpop.permute.xlu0 %99
    %vm101 = vcmp.eq.s32.totalorder %v97, %v72
    %vm102 = vcmp.eq.s32.totalorder %v100, %v72
    %v103 = vsel %vm101, 1, 0
    %v104 = vsel %vm102, 1, 0
    %v105 = vcvt.s32.f32 %v103
    %v106 = vcvt.s32.f32 %v104
    %v107 = vld [vmem:[%s5] sm:$0xff]
    %vm108 = vcmask 64512
    %v110 = vsel %vm108, %v105, 0
    %v113 = vsel %vm108, %v106, 0
    %115 = vmatprep.subr.mxu0 0.0
    %116 = vmatpush1.msra.mxu0 0.0
    %117 = vmatprep.subr.mxu0 0.0
    %118 = vmatpush1.msra.mxu0 0.0
    %119 = vmatprep.subr.mxu0 0.0
    %120 = vmatpush1.msra.mxu0 0.0
    %121 = vmatprep.subr.mxu0 0.0
    %122 = vmatpush1.msra.mxu0 0.0
    %123 = vmatprep.subr.mxu0 0.0
    %124 = vmatpush1.msra.mxu0 0.0
    %125 = vmatprep.subr.mxu0 0.0
    %126 = vmatpush1.msra.mxu0 0.0
    %127 = vmatprep.subr.mxu0 0.0
    %128 = vmatpush1.msra.mxu0 0.0
    %129 = vmatprep.subr.mxu0 0.0
    %130 = vmatpush1.msra.mxu0 0.0
    %131 = vmatprep.subr.mxu0 0.0
    %132 = vmatpush1.msra.mxu0 0.0
    %133 = vmatprep.subr.mxu0 0.0
    %134 = vmatpush1.msra.mxu0 0.0
    %135 = vmatprep.subr.mxu0 0.0
    %136 = vmatpush1.msra.mxu0 0.0
    %137 = vmatprep.subr.mxu0 0.0
    %138 = vmatpush1.msra.mxu0 0.0
    %139 = vmatprep.subr.mxu0 0.0
    %140 = vmatpush1.msra.mxu0 0.0
    %141 = vmatprep.subr.mxu0 0.0
    %142 = vmatpush1.msra.mxu0 0.0
    %143 = vmatprep.subr.mxu0 0.0
    %144 = vmatpush1.msra.mxu0 0.0
    %145 = vmatprep.subr.mxu0 0.0
    %146 = vmatpush1.msra.mxu0 %v107
    %147 = vmatprep.subr.mxu0 0.0
    %148 = vmatpush2.msra.mxu0 0.0
    %149 = vmatprep.subr.mxu0 0.0
    %150 = vmatpush2.msra.mxu0 0.0
    %151 = vmatprep.subr.mxu0 0.0
    %152 = vmatpush2.msra.mxu0 0.0
    %153 = vmatprep.subr.mxu0 0.0
    %154 = vmatpush2.msra.mxu0 0.0
    %155 = vmatprep.subr.mxu0 0.0
    %156 = vmatpush2.msra.mxu0 0.0
    %157 = vmatprep.subr.mxu0 0.0
    %158 = vmatpush2.msra.mxu0 0.0
    %159 = vmatprep.subr.mxu0 0.0
    %160 = vmatpush2.msra.mxu0 0.0
    %161 = vmatprep.subr.mxu0 0.0
    %162 = vmatpush2.msra.mxu0 0.0
    %163 = vmatprep.subr.mxu0 0.0
    %164 = vmatpush2.msra.mxu0 0.0
    %165 = vmatprep.subr.mxu0 0.0
    %166 = vmatpush2.msra.mxu0 0.0
    %167 = vmatprep.subr.mxu0 0.0
    %168 = vmatpush2.msra.mxu0 0.0
    %169 = vmatprep.subr.mxu0 0.0
    %170 = vmatpush2.msra.mxu0 0.0
    %171 = vmatprep.subr.mxu0 0.0
    %172 = vmatpush2.msra.mxu0 0.0
    %173 = vmatprep.subr.mxu0 0.0
    %174 = vmatpush2.msra.mxu0 0.0
    %175 = vmatprep.subr.mxu0 0.0
    %176 = vmatpush2.msra.mxu0 0.0
    %177 = vmatprep.subr.mxu0 0.0
    %178 = vmatpush2.msra.mxu0 0.0
    %179 = vmatprep.mubr.f32.mxu0 0.0
    %180 = vmatmul.mubr.f32.gmra.mxu0 %v110
    %v181 = vpop.f32.mrf.mxu0
    %v182 = vadd.f32 0.0, %v181
    %v183 = vpop.f32.mrf.mxu0
    %184 = vmatprep.mubr.f32.mxu0 0.0
    %185 = vmatmul.mubr.f32.gmra.mxu0 %v113
    %v186 = vpop.f32.mrf.mxu0
    %v187 = vadd.f32 0.0, %v186
    %v188 = vpop.f32.mrf.mxu0
    %189 = vdwg.mxu0
    %vm190 = vcmask 523264
    %v192 = vsel %vm190, %v83, 0
    %v195 = vsel %vm190, %v84, 0
    %197 = vmatprep.subr.mxu0 0.0
    %198 = vmatpush1.msra.mxu0 0.0
    %199 = vmatprep.subr.mxu0 0.0
    %200 = vmatpush1.msra.mxu0 0.0
    %201 = vmatprep.subr.mxu0 0.0
    %202 = vmatpush1.msra.mxu0 0.0
    %203 = vmatprep.subr.mxu0 0.0
    %204 = vmatpush1.msra.mxu0 0.0
    %205 = vmatprep.subr.mxu0 0.0
    %206 = vmatpush1.msra.mxu0 0.0
    %207 = vmatprep.subr.mxu0 0.0
    %208 = vmatpush1.msra.mxu0 0.0
    %209 = vmatprep.subr.mxu0 0.0
    %210 = vmatpush1.msra.mxu0 0.0
    %211 = vmatprep.subr.mxu0 0.0
    %212 = vmatpush1.msra.mxu0 0.0
    %213 = vmatprep.subr.mxu0 0.0
    %214 = vmatpush1.msra.mxu0 %v92
    %215 = vmatprep.subr.mxu0 0.0
    %216 = vmatpush1.msra.mxu0 %v91
    %217 = vmatprep.subr.mxu0 0.0
    %218 = vmatpush1.msra.mxu0 %v90
    %219 = vmatprep.subr.mxu0 0.0
    %220 = vmatpush1.msra.mxu0 %v89
    %221 = vmatprep.subr.mxu0 0.0
    %222 = vmatpush1.msra.mxu0 %v88
    %223 = vmatprep.subr.mxu0 0.0
    %224 = vmatpush1.msra.mxu0 %v87
    %225 = vmatprep.subr.mxu0 0.0
    %226 = vmatpush1.msra.mxu0 %v86
    %227 = vmatprep.subr.mxu0 0.0
    %228 = vmatpush1.msra.mxu0 %v85
    %229 = vmatprep.subr.mxu0 0.0
    %230 = vmatpush2.msra.mxu0 0.0
    %231 = vmatprep.subr.mxu0 0.0
    %232 = vmatpush2.msra.mxu0 0.0
    %233 = vmatprep.subr.mxu0 0.0
    %234 = vmatpush2.msra.mxu0 0.0
    %235 = vmatprep.subr.mxu0 0.0
    %236 = vmatpush2.msra.mxu0 0.0
    %237 = vmatprep.subr.mxu0 0.0
    %238 = vmatpush2.msra.mxu0 0.0
    %239 = vmatprep.subr.mxu0 0.0
    %240 = vmatpush2.msra.mxu0 0.0
    %241 = vmatprep.subr.mxu0 0.0
    %242 = vmatpush2.msra.mxu0 0.0
    %243 = vmatprep.subr.mxu0 0.0
    %244 = vmatpush2.msra.mxu0 0.0
    %245 = vmatprep.subr.mxu0 0.0
    %246 = vmatpush2.msra.mxu0 0.0
    %247 = vmatprep.subr.mxu0 0.0
    %248 = vmatpush2.msra.mxu0 0.0
    %249 = vmatprep.subr.mxu0 0.0
    %250 = vmatpush2.msra.mxu0 0.0
    %251 = vmatprep.subr.mxu0 0.0
    %252 = vmatpush2.msra.mxu0 0.0
    %253 = vmatprep.subr.mxu0 0.0
    %254 = vmatpush2.msra.mxu0 0.0
    %255 = vmatprep.subr.mxu0 0.0
    %256 = vmatpush2.msra.mxu0 0.0
    %257 = vmatprep.subr.mxu0 0.0
    %258 = vmatpush2.msra.mxu0 0.0
    %259 = vmatprep.subr.mxu0 0.0
    %260 = vmatpush2.msra.mxu0 0.0
    %261 = vmatprep.mubr.f32.mxu0 0.0
    %262 = vmatmul.mubr.f32.gmra.mxu0 %v192
    %v263 = vpop.f32.mrf.mxu0
    %v264 = vadd.f32 %v182, %v263
    %v265 = vpop.f32.mrf.mxu0
    %266 = vmatprep.mubr.f32.mxu0 0.0
    %267 = vmatmul.mubr.f32.gmra.mxu0 %v195
    %v268 = vpop.f32.mrf.mxu0
    %v269 = vadd.f32 %v187, %v268
    %v270 = vpop.f32.mrf.mxu0
    %271 = vdwg.mxu0
    %v272 = vld [vmem:[%s1] sm:$0xff]
    %v273 = vld [vmem:[%s1 + $0x8] sm:$0xff]
    %274 = vset.pattern.permute.xlu0 0
    %275 = vperm.xlu0 %274, %v272
    %v276 = vpop.permute.xlu0 %275
    %277 = vset.pattern.permute.xlu0 0
    %278 = vperm.xlu0 %277, %v273
    %v279 = vpop.permute.xlu0 %278
    %vm280 = vcmp.eq.s32.totalorder %v276, %v72
    %vm281 = vcmp.eq.s32.totalorder %v279, %v72
    %v282 = vsel %vm280, 1, 0
    %v283 = vsel %vm281, 1, 0
    %v284 = vcvt.s32.f32 %v282
    %v285 = vcvt.s32.f32 %v283
    %v286 = vld [vmem:[%s6] sm:$0xff]
    %v288 = vsel %vm108, %v284, 0
    %v291 = vsel %vm108, %v285, 0
    %293 = vmatprep.subr.mxu0 0.0
    %294 = vmatpush1.msra.mxu0 0.0
    %295 = vmatprep.subr.mxu0 0.0
    %296 = vmatpush1.msra.mxu0 0.0
    %297 = vmatprep.subr.mxu0 0.0
    %298 = vmatpush1.msra.mxu0 0.0
    %299 = vmatprep.subr.mxu0 0.0
    %300 = vmatpush1.msra.mxu0 0.0
    %301 = vmatprep.subr.mxu0 0.0
    %302 = vmatpush1.msra.mxu0 0.0
    %303 = vmatprep.subr.mxu0 0.0
    %304 = vmatpush1.msra.mxu0 0.0
    %305 = vmatprep.subr.mxu0 0.0
    %306 = vmatpush1.msra.mxu0 0.0
    %307 = vmatprep.subr.mxu0 0.0
    %308 = vmatpush1.msra.mxu0 0.0
    %309 = vmatprep.subr.mxu0 0.0
    %310 = vmatpush1.msra.mxu0 0.0
    %311 = vmatprep.subr.mxu0 0.0
    %312 = vmatpush1.msra.mxu0 0.0
    %313 = vmatprep.subr.mxu0 0.0
    %314 = vmatpush1.msra.mxu0 0.0
    %315 = vmatprep.subr.mxu0 0.0
    %316 = vmatpush1.msra.mxu0 0.0
    %317 = vmatprep.subr.mxu0 0.0
    %318 = vmatpush1.msra.mxu0 0.0
    %319 = vmatprep.subr.mxu0 0.0
    %320 = vmatpush1.msra.mxu0 0.0
    %321 = vmatprep.subr.mxu0 0.0
    %322 = vmatpush1.msra.mxu0 0.0
    %323 = vmatprep.subr.mxu0 0.0
    %324 = vmatpush1.msra.mxu0 %v286
    %325 = vmatprep.subr.mxu0 0.0
    %326 = vmatpush2.msra.mxu0 0.0
    %327 = vmatprep.subr.mxu0 0.0
    %328 = vmatpush2.msra.mxu0 0.0
    %329 = vmatprep.subr.mxu0 0.0
    %330 = vmatpush2.msra.mxu0 0.0
    %331 = vmatprep.subr.mxu0 0.0
    %332 = vmatpush2.msra.mxu0 0.0
    %333 = vmatprep.subr.mxu0 0.0
    %334 = vmatpush2.msra.mxu0 0.0
    %335 = vmatprep.subr.mxu0 0.0
    %336 = vmatpush2.msra.mxu0 0.0
    %337 = vmatprep.subr.mxu0 0.0
    %338 = vmatpush2.msra.mxu0 0.0
    %339 = vmatprep.subr.mxu0 0.0
    %340 = vmatpush2.msra.mxu0 0.0
    %341 = vmatprep.subr.mxu0 0.0
    %342 = vmatpush2.msra.mxu0 0.0
    %343 = vmatprep.subr.mxu0 0.0
    %344 = vmatpush2.msra.mxu0 0.0
    %345 = vmatprep.subr.mxu0 0.0
    %346 = vmatpush2.msra.mxu0 0.0
    %347 = vmatprep.subr.mxu0 0.0
    %348 = vmatpush2.msra.mxu0 0.0
    %349 = vmatprep.subr.mxu0 0.0
    %350 = vmatpush2.msra.mxu0 0.0
    %351 = vmatprep.subr.mxu0 0.0
    %352 = vmatpush2.msra.mxu0 0.0
    %353 = vmatprep.subr.mxu0 0.0
    %354 = vmatpush2.msra.mxu0 0.0
    %355 = vmatprep.subr.mxu0 0.0
    %356 = vmatpush2.msra.mxu0 0.0
    %357 = vmatprep.mubr.f32.mxu0 0.0
    %358 = vmatmul.mubr.f32.gmra.mxu0 %v288
    %v359 = vpop.f32.mrf.mxu0
    %v360 = vadd.f32 0.0, %v359
    %v361 = vpop.f32.mrf.mxu0
    %362 = vmatprep.mubr.f32.mxu0 0.0
    %363 = vmatmul.mubr.f32.gmra.mxu0 %v291
    %v364 = vpop.f32.mrf.mxu0
    %v365 = vadd.f32 0.0, %v364
    %v366 = vpop.f32.mrf.mxu0
    %367 = vdwg.mxu0
    %v368 = vadd.f32 %v264, %v360
    %v369 = vadd.f32 %v269, %v365
    %v370 = vld [vmem:[%s7] sm:$0x1]
    %v371 = vld [vmem:[%s8] sm:$0x1]
    %vm372 = vcmask 261120
    %v373 = vsel %vm372, %v368, 0.0
    %374 = vadd.xlane.f32.xlu0 %v373
    %v375 = vpop.xlane.xlu0 %374
    %v376 = vsel %vm372, %v369, 0.0
    %377 = vadd.xlane.f32.xlu0 %v376
    %v378 = vpop.xlane.xlu0 %377
    %v379 = vrcp.pop 32.0
    %v380 = vmul.f32 %v375, %v379
    %v381 = vmul.f32 %v378, %v379
    %v382 = vsub.f32 %v368, %v380
    %v383 = vsub.f32 %v369, %v381
    %v384 = vmul.f32 %v382, %v382
    %v385 = vmul.f32 %v383, %v383
    %v386 = vsel %vm372, %v384, 0.0
    %387 = vadd.xlane.f32.xlu0 %v386
    %v388 = vpop.xlane.xlu0 %387
    %v389 = vsel %vm372, %v385, 0.0
    %390 = vadd.xlane.f32.xlu0 %v389
    %v391 = vpop.xlane.xlu0 %390
    %v392 = vmul.f32 %v388, %v379
    %v393 = vmul.f32 %v391, %v379
    %v394 = vadd.f32 %v392, 1e-06
    %v395 = vadd.f32 %v393, 1e-06
    %v396 = vrsqrt.pop %v394
    %v397 = vrsqrt.pop %v395
    %v398 = vmul.f32 %v382, %v396
    %v399 = vmul.f32 %v383, %v397
    %v401 = vlaneseq
    %v402 = vshrl.u32 %v401, 7
    %v403 = vsub.s32 0, %v402
    %v404 = vrot.slane %v370, %v403
    %v406 = vmul.f32 %v398, %v404
    %v407 = vmul.f32 %v399, %v404
    %v409 = vlaneseq
    %v410 = vshrl.u32 %v409, 7
    %v411 = vsub.s32 0, %v410
    %v412 = vrot.slane %v371, %v411
    %v414 = vadd.f32 %v406, %v412
    %v415 = vadd.f32 %v407, %v412
    %v416 = vld [vmem:[%s3] sm:$0xff]
    %v417 = vld [vmem:[%s3 + $0x8] sm:$0xff]
    %v418 = vld [vmem:[%s9] sm:$0xff]
    %v419 = vld [vmem:[%s9 + $0x8] sm:$0xff]
    %v420 = vld [vmem:[%s9 + $0x10] sm:$0xff]
    %v421 = vld [vmem:[%s9 + $0x18] sm:$0xff]
    %v422 = vld [vmem:[%s10] sm:$0x1]
    %v424 = vlaneseq
    %v425 = vshrl.u32 %v424, 7
    %v426 = vsub.s32 0, %v425
    %v427 = vrot.slane %v422, %v426
    %v430 = vsel %vm372, %v414, 0
    %v433 = vsel %vm372, %v415, 0
    %435 = vmatprep.subr.mxu0 0.0
    %436 = vmatpush1.msra.mxu0 0.0
    %437 = vmatprep.subr.mxu0 0.0
    %438 = vmatpush1.msra.mxu0 0.0
    %439 = vmatprep.subr.mxu0 0.0
    %440 = vmatpush1.msra.mxu0 0.0
    %441 = vmatprep.subr.mxu0 0.0
    %442 = vmatpush1.msra.mxu0 0.0
    %443 = vmatprep.subr.mxu0 0.0
    %444 = vmatpush1.msra.mxu0 0.0
    %445 = vmatprep.subr.mxu0 0.0
    %446 = vmatpush1.msra.mxu0 0.0
    %447 = vmatprep.subr.mxu0 0.0
    %448 = vmatpush1.msra.mxu0 0.0
    %449 = vmatprep.subr.mxu0 0.0
    %450 = vmatpush1.msra.mxu0 0.0
    %451 = vmatprep.subr.mxu0 0.0
    %452 = vmatpush1.msra.mxu0 0.0
    %453 = vmatprep.subr.mxu0 0.0
    %454 = vmatpush1.msra.mxu0 0.0
    %455 = vmatprep.subr.mxu0 0.0
    %456 = vmatpush1.msra.mxu0 0.0
    %457 = vmatprep.subr.mxu0 0.0
    %458 = vmatpush1.msra.mxu0 0.0
    %459 = vmatprep.subr.mxu0 0.0
    %460 = vmatpush1.msra.mxu0 %v421
    %461 = vmatprep.subr.mxu0 0.0
    %462 = vmatpush1.msra.mxu0 %v420
    %463 = vmatprep.subr.mxu0 0.0
    %464 = vmatpush1.msra.mxu0 %v419
    %465 = vmatprep.subr.mxu0 0.0
    %466 = vmatpush1.msra.mxu0 %v418
    %467 = vmatprep.subr.mxu0 0.0
    %468 = vmatpush2.msra.mxu0 0.0
    %469 = vmatprep.subr.mxu0 0.0
    %470 = vmatpush2.msra.mxu0 0.0
    %471 = vmatprep.subr.mxu0 0.0
    %472 = vmatpush2.msra.mxu0 0.0
    %473 = vmatprep.subr.mxu0 0.0
    %474 = vmatpush2.msra.mxu0 0.0
    %475 = vmatprep.subr.mxu0 0.0
    %476 = vmatpush2.msra.mxu0 0.0
    %477 = vmatprep.subr.mxu0 0.0
    %478 = vmatpush2.msra.mxu0 0.0
    %479 = vmatprep.subr.mxu0 0.0
    %480 = vmatpush2.msra.mxu0 0.0
    %481 = vmatprep.subr.mxu0 0.0
    %482 = vmatpush2.msra.mxu0 0.0
    %483 = vmatprep.subr.mxu0 0.0
    %484 = vmatpush2.msra.mxu0 0.0
    %485 = vmatprep.subr.mxu0 0.0
    %486 = vmatpush2.msra.mxu0 0.0
    %487 = vmatprep.subr.mxu0 0.0
    %488 = vmatpush2.msra.mxu0 0.0
    %489 = vmatprep.subr.mxu0 0.0
    %490 = vmatpush2.msra.mxu0 0.0
    %491 = vmatprep.subr.mxu0 0.0
    %492 = vmatpush2.msra.mxu0 0.0
    %493 = vmatprep.subr.mxu0 0.0
    %494 = vmatpush2.msra.mxu0 0.0
    %495 = vmatprep.subr.mxu0 0.0
    %496 = vmatpush2.msra.mxu0 0.0
    %497 = vmatprep.subr.mxu0 0.0
    %498 = vmatpush2.msra.mxu0 0.0
    %499 = vmatprep.mubr.f32.mxu0 0.0
    %500 = vmatmul.mubr.f32.gmra.mxu0 %v430
    %v501 = vpop.f32.mrf.mxu0
    %v502 = vadd.f32 %v427, %v501
    %v503 = vpop.f32.mrf.mxu0
    %504 = vmatprep.mubr.f32.mxu0 0.0
    %505 = vmatmul.mubr.f32.gmra.mxu0 %v433
    %v506 = vpop.f32.mrf.mxu0
    %v507 = vadd.f32 %v427, %v506
    %v508 = vpop.f32.mrf.mxu0
    %509 = vdwg.mxu0
    %v510 = vld [vmem:[%s11] sm:$0xff]
    %v511 = vld [vmem:[%s11 + $0x8] sm:$0xff]
    %v512 = vld [vmem:[%s11 + $0x10] sm:$0xff]
    %v513 = vld [vmem:[%s11 + $0x18] sm:$0xff]
    %v514 = vld [vmem:[%s12] sm:$0x1]
    %517 = vrot.lane.b32.xlu0 %v502, 96
    %v518 = vpop.permute.xlu0 %517
    %519 = vrot.lane.b32.xlu0 %v507, 96
    %v520 = vpop.permute.xlu0 %519
    %vm521 = vcmask 130048
    %v522 = vsel %vm521, %v502, 0
    %v524 = vsel %vm521, %v507, 0
    %v526 = vsel %vm521, %v518, 0
    %v528 = vsel %vm521, %v520, 0
    %530 = vmatprep.subr.mxu0 0.0
    %531 = vmatpush1.xpose.msra.mxu0 0.0
    %532 = vmatprep.subr.mxu0 0.0
    %533 = vmatpush1.xpose.msra.mxu0 0.0
    %534 = vmatprep.subr.mxu0 0.0
    %535 = vmatpush1.xpose.msra.mxu0 0.0
    %536 = vmatprep.subr.mxu0 0.0
    %537 = vmatpush1.xpose.msra.mxu0 0.0
    %538 = vmatprep.subr.mxu0 0.0
    %539 = vmatpush1.xpose.msra.mxu0 0.0
    %540 = vmatprep.subr.mxu0 0.0
    %541 = vmatpush1.xpose.msra.mxu0 0.0
    %542 = vmatprep.subr.mxu0 0.0
    %543 = vmatpush1.xpose.msra.mxu0 0.0
    %544 = vmatprep.subr.mxu0 0.0
    %545 = vmatpush1.xpose.msra.mxu0 0.0
    %546 = vmatprep.subr.mxu0 0.0
    %547 = vmatpush1.xpose.msra.mxu0 0.0
    %548 = vmatprep.subr.mxu0 0.0
    %549 = vmatpush1.xpose.msra.mxu0 0.0
    %550 = vmatprep.subr.mxu0 0.0
    %551 = vmatpush1.xpose.msra.mxu0 0.0
    %552 = vmatprep.subr.mxu0 0.0
    %553 = vmatpush1.xpose.msra.mxu0 0.0
    %554 = vmatprep.subr.mxu0 0.0
    %555 = vmatpush1.xpose.msra.mxu0 0.0
    %556 = vmatprep.subr.mxu0 0.0
    %557 = vmatpush1.xpose.msra.mxu0 0.0
    %558 = vmatprep.subr.mxu0 0.0
    %559 = vmatpush1.xpose.msra.mxu0 %v528
    %560 = vmatprep.subr.mxu0 0.0
    %561 = vmatpush1.xpose.msra.mxu0 %v526
    %562 = vmatprep.subr.mxu0 0.0
    %563 = vmatpush2.xpose.msra.mxu0 0.0
    %564 = vmatprep.subr.mxu0 0.0
    %565 = vmatpush2.xpose.msra.mxu0 0.0
    %566 = vmatprep.subr.mxu0 0.0
    %567 = vmatpush2.xpose.msra.mxu0 0.0
    %568 = vmatprep.subr.mxu0 0.0
    %569 = vmatpush2.xpose.msra.mxu0 0.0
    %570 = vmatprep.subr.mxu0 0.0
    %571 = vmatpush2.xpose.msra.mxu0 0.0
    %572 = vmatprep.subr.mxu0 0.0
    %573 = vmatpush2.xpose.msra.mxu0 0.0
    %574 = vmatprep.subr.mxu0 0.0
    %575 = vmatpush2.xpose.msra.mxu0 0.0
    %576 = vmatprep.subr.mxu0 0.0
    %577 = vmatpush2.xpose.msra.mxu0 0.0
    %578 = vmatprep.subr.mxu0 0.0
    %579 = vmatpush2.xpose.msra.mxu0 0.0
    %580 = vmatprep.subr.mxu0 0.0
    %581 = vmatpush2.xpose.msra.mxu0 0.0
    %582 = vmatprep.subr.mxu0 0.0
    %583 = vmatpush2.xpose.msra.mxu0 0.0
    %584 = vmatprep.subr.mxu0 0.0
    %585 = vmatpush2.xpose.msra.mxu0 0.0
    %586 = vmatprep.subr.mxu0 0.0
    %587 = vmatpush2.xpose.msra.mxu0 0.0
    %588 = vmatprep.subr.mxu0 0.0
    %589 = vmatpush2.xpose.msra.mxu0 0.0
    %590 = vmatprep.subr.mxu0 0.0
    %591 = vmatpush2.xpose.msra.mxu0 0.0
    %592 = vmatprep.subr.mxu0 0.0
    %593 = vmatpush2.xpose.msra.mxu0 0.0
    %594 = vmatprep.mubr.f32.mxu0 0.0
    %595 = vmatmul.mubr.f32.gmra.mxu0 %v522
    %v596 = vpop.f32.mrf.mxu0
    %v597 = vadd.f32 0.0, %v596
    %v598 = vpop.f32.mrf.mxu0
    %599 = vmatprep.mubr.f32.mxu0 0.0
    %600 = vmatmul.mubr.f32.gmra.mxu0 %v524
    %v601 = vpop.f32.mrf.mxu0
    %v602 = vadd.f32 0.0, %v601
    %v603 = vpop.f32.mrf.mxu0
    %604 = vdwg.mxu0
    %v605 = vmul.f32 %v597, 0.25
    %v606 = vmul.f32 %v602, 0.25
    %v607 = vadd.f32 %v605, %v416
    %v608 = vadd.f32 %v606, %v417
    %v609 = vsel %vm521, %v607, -inf
    %610 = vmax.xlane.f32.xlu0 %v609
    %v611 = vpop.xlane.xlu0 %610
    %v612 = vsel %vm521, %v608, -inf
    %613 = vmax.xlane.f32.xlu0 %v612
    %v614 = vpop.xlane.xlu0 %613
    %v615 = vsub.f32 %v607, %v611
    %v616 = vsub.f32 %v608, %v614
    %v617 = vmul.f32 %v615, 1.442695
    %v618 = vpow.pop %v617
    %v619 = vmul.f32 %v616, 1.442695
    %v620 = vpow.pop %v619
    %v621 = vsel %vm521, %v618, 0.0
    %622 = vadd.xlane.f32.xlu0 %v621
    %v623 = vpop.xlane.xlu0 %622
    %v624 = vsel %vm521, %v620, 0.0
    %625 = vadd.xlane.f32.xlu0 %v624
    %v626 = vpop.xlane.xlu0 %625
    %v627 = vrcp.pop %v623
    %v628 = vrcp.pop %v626
    %v629 = vmul.f32 %v618, %v627
    %v630 = vmul.f32 %v620, %v628
    %631 = vrot.lane.b32.xlu0 %v502, 64
    %v632 = vpop.permute.xlu0 %631
    %633 = vrot.lane.b32.xlu0 %v507, 64
    %v634 = vpop.permute.xlu0 %633
    %v638 = vsel %vm521, %v629, 0
    %v641 = vsel %vm521, %v630, 0
    %643 = vmatprep.subr.mxu0 0.0
    %644 = vmatpush1.msra.mxu0 0.0
    %645 = vmatprep.subr.mxu0 0.0
    %646 = vmatpush1.msra.mxu0 0.0
    %647 = vmatprep.subr.mxu0 0.0
    %648 = vmatpush1.msra.mxu0 0.0
    %649 = vmatprep.subr.mxu0 0.0
    %650 = vmatpush1.msra.mxu0 0.0
    %651 = vmatprep.subr.mxu0 0.0
    %652 = vmatpush1.msra.mxu0 0.0
    %653 = vmatprep.subr.mxu0 0.0
    %654 = vmatpush1.msra.mxu0 0.0
    %655 = vmatprep.subr.mxu0 0.0
    %656 = vmatpush1.msra.mxu0 0.0
    %657 = vmatprep.subr.mxu0 0.0
    %658 = vmatpush1.msra.mxu0 0.0
    %659 = vmatprep.subr.mxu0 0.0
    %660 = vmatpush1.msra.mxu0 0.0
    %661 = vmatprep.subr.mxu0 0.0
    %662 = vmatpush1.msra.mxu0 0.0
    %663 = vmatprep.subr.mxu0 0.0
    %664 = vmatpush1.msra.mxu0 0.0
    %665 = vmatprep.subr.mxu0 0.0
    %666 = vmatpush1.msra.mxu0 0.0
    %667 = vmatprep.subr.mxu0 0.0
    %668 = vmatpush1.msra.mxu0 0.0
    %669 = vmatprep.subr.mxu0 0.0
    %670 = vmatpush1.msra.mxu0 0.0
    %671 = vmatprep.subr.mxu0 0.0
    %672 = vmatpush1.msra.mxu0 %v634
    %673 = vmatprep.subr.mxu0 0.0
    %674 = vmatpush1.msra.mxu0 %v632
    %675 = vmatprep.subr.mxu0 0.0
    %676 = vmatpush2.msra.mxu0 0.0
    %677 = vmatprep.subr.mxu0 0.0
    %678 = vmatpush2.msra.mxu0 0.0
    %679 = vmatprep.subr.mxu0 0.0
    %680 = vmatpush2.msra.mxu0 0.0
    %681 = vmatprep.subr.mxu0 0.0
    %682 = vmatpush2.msra.mxu0 0.0
    %683 = vmatprep.subr.mxu0 0.0
    %684 = vmatpush2.msra.mxu0 0.0
    %685 = vmatprep.subr.mxu0 0.0
    %686 = vmatpush2.msra.mxu0 0.0
    %687 = vmatprep.subr.mxu0 0.0
    %688 = vmatpush2.msra.mxu0 0.0
    %689 = vmatprep.subr.mxu0 0.0
    %690 = vmatpush2.msra.mxu0 0.0
    %691 = vmatprep.subr.mxu0 0.0
    %692 = vmatpush2.msra.mxu0 0.0
    %693 = vmatprep.subr.mxu0 0.0
    %694 = vmatpush2.msra.mxu0 0.0
    %695 = vmatprep.subr.mxu0 0.0
    %696 = vmatpush2.msra.mxu0 0.0
    %697 = vmatprep.subr.mxu0 0.0
    %698 = vmatpush2.msra.mxu0 0.0
    %699 = vmatprep.subr.mxu0 0.0
    %700 = vmatpush2.msra.mxu0 0.0
    %701 = vmatprep.subr.mxu0 0.0
    %702 = vmatpush2.msra.mxu0 0.0
    %703 = vmatprep.subr.mxu0 0.0
    %704 = vmatpush2.msra.mxu0 0.0
    %705 = vmatprep.subr.mxu0 0.0
    %706 = vmatpush2.msra.mxu0 0.0
    %707 = vmatprep.mubr.f32.mxu0 0.0
    %708 = vmatmul.mubr.f32.gmra.mxu0 %v638
    %v709 = vpop.f32.mrf.mxu0
    %v710 = vadd.f32 0.0, %v709
    %v711 = vpop.f32.mrf.mxu0
    %712 = vmatprep.mubr.f32.mxu0 0.0
    %713 = vmatmul.mubr.f32.gmra.mxu0 %v641
    %v714 = vpop.f32.mrf.mxu0
    %v715 = vadd.f32 0.0, %v714
    %v716 = vpop.f32.mrf.mxu0
    %717 = vdwg.mxu0
    %v719 = vsel %vm521, %v710, 0
    %v722 = vsel %vm521, %v715, 0
    %724 = vmatprep.subr.mxu0 0.0
    %725 = vmatpush1.msra.mxu0 0.0
    %726 = vmatprep.subr.mxu0 0.0
    %727 = vmatpush1.msra.mxu0 0.0
    %728 = vmatprep.subr.mxu0 0.0
    %729 = vmatpush1.msra.mxu0 0.0
    %730 = vmatprep.subr.mxu0 0.0
    %731 = vmatpush1.msra.mxu0 0.0
    %732 = vmatprep.subr.mxu0 0.0
    %733 = vmatpush1.msra.mxu0 0.0
    %734 = vmatprep.subr.mxu0 0.0
    %735 = vmatpush1.msra.mxu0 0.0
    %736 = vmatprep.subr.mxu0 0.0
    %737 = vmatpush1.msra.mxu0 0.0
    %738 = vmatprep.subr.mxu0 0.0
    %739 = vmatpush1.msra.mxu0 0.0
    %740 = vmatprep.subr.mxu0 0.0
    %741 = vmatpush1.msra.mxu0 0.0
    %742 = vmatprep.subr.mxu0 0.0
    %743 = vmatpush1.msra.mxu0 0.0
    %744 = vmatprep.subr.mxu0 0.0
    %745 = vmatpush1.msra.mxu0 0.0
    %746 = vmatprep.subr.mxu0 0.0
    %747 = vmatpush1.msra.mxu0 0.0
    %748 = vmatprep.subr.mxu0 0.0
    %749 = vmatpush1.msra.mxu0 0.0
    %750 = vmatprep.subr.mxu0 0.0
    %751 = vmatpush1.msra.mxu0 0.0
    %752 = vmatprep.subr.mxu0 0.0
    %753 = vmatpush1.msra.mxu0 %v511
    %754 = vmatprep.subr.mxu0 0.0
    %755 = vmatpush1.msra.mxu0 %v510
    %756 = vmatprep.subr.mxu0 0.0
    %757 = vmatpush2.msra.mxu0 0.0
    %758 = vmatprep.subr.mxu0 0.0
    %759 = vmatpush2.msra.mxu0 0.0
    %760 = vmatprep.subr.mxu0 0.0
    %761 = vmatpush2.msra.mxu0 0.0
    %762 = vmatprep.subr.mxu0 0.0
    %763 = vmatpush2.msra.mxu0 0.0
    %764 = vmatprep.subr.mxu0 0.0
    %765 = vmatpush2.msra.mxu0 0.0
    %766 = vmatprep.subr.mxu0 0.0
    %767 = vmatpush2.msra.mxu0 0.0
    %768 = vmatprep.subr.mxu0 0.0
    %769 = vmatpush2.msra.mxu0 0.0
    %770 = vmatprep.subr.mxu0 0.0
    %771 = vmatpush2.msra.mxu0 0.0
    %772 = vmatprep.subr.mxu0 0.0
    %773 = vmatpush2.msra.mxu0 0.0
    %774 = vmatprep.subr.mxu0 0.0
    %775 = vmatpush2.msra.mxu0 0.0
    %776 = vmatprep.subr.mxu0 0.0
    %777 = vmatpush2.msra.mxu0 0.0
    %778 = vmatprep.subr.mxu0 0.0
    %779 = vmatpush2.msra.mxu0 0.0
    %780 = vmatprep.subr.mxu0 0.0
    %781 = vmatpush2.msra.mxu0 0.0
    %782 = vmatprep.subr.mxu0 0.0
    %783 = vmatpush2.msra.mxu0 0.0
    %784 = vmatprep.subr.mxu0 0.0
    %785 = vmatpush2.msra.mxu0 0.0
    %786 = vmatprep.subr.mxu0 0.0
    %787 = vmatpush2.msra.mxu0 0.0
    %788 = vmatprep.mubr.f32.mxu0 0.0
    %789 = vmatmul.mubr.f32.gmra.mxu0 %v719
    %v790 = vpop.f32.mrf.mxu0
    %v791 = vadd.f32 0.0, %v790
    %v792 = vpop.f32.mrf.mxu0
    %793 = vmatprep.mubr.f32.mxu0 0.0
    %794 = vmatmul.mubr.f32.gmra.mxu0 %v722
    %v795 = vpop.f32.mrf.mxu0
    %v796 = vadd.f32 0.0, %v795
    %v797 = vpop.f32.mrf.mxu0
    %798 = vdwg.mxu0
    %v800 = vlaneseq
    %v801 = vshrl.u32 %v800, 7
    %v802 = vsub.s32 0, %v801
    %v803 = vrot.slane %v514, %v802
    %v805 = vadd.f32 %v803, %v791
    %v806 = vadd.f32 %v803, %v796
    %807 = vrot.lane.b32.xlu0 %v502, 112
    %v808 = vpop.permute.xlu0 %807
    %809 = vrot.lane.b32.xlu0 %v507, 112
    %v810 = vpop.permute.xlu0 %809
    %811 = vrot.lane.b32.xlu0 %v502, 80
    %v812 = vpop.permute.xlu0 %811
    %813 = vrot.lane.b32.xlu0 %v507, 80
    %v814 = vpop.permute.xlu0 %813
    %v815 = vsel %vm521, %v808, 0
    %v817 = vsel %vm521, %v810, 0
    %v819 = vsel %vm521, %v812, 0
    %v821 = vsel %vm521, %v814, 0
    %823 = vmatprep.subr.mxu0 0.0
    %824 = vmatpush1.xpose.msra.mxu0 0.0
    %825 = vmatprep.subr.mxu0 0.0
    %826 = vmatpush1.xpose.msra.mxu0 0.0
    %827 = vmatprep.subr.mxu0 0.0
    %828 = vmatpush1.xpose.msra.mxu0 0.0
    %829 = vmatprep.subr.mxu0 0.0
    %830 = vmatpush1.xpose.msra.mxu0 0.0
    %831 = vmatprep.subr.mxu0 0.0
    %832 = vmatpush1.xpose.msra.mxu0 0.0
    %833 = vmatprep.subr.mxu0 0.0
    %834 = vmatpush1.xpose.msra.mxu0 0.0
    %835 = vmatprep.subr.mxu0 0.0
    %836 = vmatpush1.xpose.msra.mxu0 0.0
    %837 = vmatprep.subr.mxu0 0.0
    %838 = vmatpush1.xpose.msra.mxu0 0.0
    %839 = vmatprep.subr.mxu0 0.0
    %840 = vmatpush1.xpose.msra.mxu0 0.0
    %841 = vmatprep.subr.mxu0 0.0
    %842 = vmatpush1.xpose.msra.mxu0 0.0
    %843 = vmatprep.subr.mxu0 0.0
    %844 = vmatpush1.xpose.msra.mxu0 0.0
    %845 = vmatprep.subr.mxu0 0.0
    %846 = vmatpush1.xpose.msra.mxu0 0.0
    %847 = vmatprep.subr.mxu0 0.0
    %848 = vmatpush1.xpose.msra.mxu0 0.0
    %849 = vmatprep.subr.mxu0 0.0
    %850 = vmatpush1.xpose.msra.mxu0 0.0
    %851 = vmatprep.subr.mxu0 0.0
    %852 = vmatpush1.xpose.msra.mxu0 %v821
    %853 = vmatprep.subr.mxu0 0.0
    %854 = vmatpush1.xpose.msra.mxu0 %v819
    %855 = vmatprep.subr.mxu0 0.0
    %856 = vmatpush2.xpose.msra.mxu0 0.0
    %857 = vmatprep.subr.mxu0 0.0
    %858 = vmatpush2.xpose.msra.mxu0 0.0
    %859 = vmatprep.subr.mxu0 0.0
    %860 = vmatpush2.xpose.msra.mxu0 0.0
    %861 = vmatprep.subr.mxu0 0.0
    %862 = vmatpush2.xpose.msra.mxu0 0.0
    %863 = vmatprep.subr.mxu0 0.0
    %864 = vmatpush2.xpose.msra.mxu0 0.0
    %865 = vmatprep.subr.mxu0 0.0
    %866 = vmatpush2.xpose.msra.mxu0 0.0
    %867 = vmatprep.subr.mxu0 0.0
    %868 = vmatpush2.xpose.msra.mxu0 0.0
    %869 = vmatprep.subr.mxu0 0.0
    %870 = vmatpush2.xpose.msra.mxu0 0.0
    %871 = vmatprep.subr.mxu0 0.0
    %872 = vmatpush2.xpose.msra.mxu0 0.0
    %873 = vmatprep.subr.mxu0 0.0
    %874 = vmatpush2.xpose.msra.mxu0 0.0
    %875 = vmatprep.subr.mxu0 0.0
    %876 = vmatpush2.xpose.msra.mxu0 0.0
    %877 = vmatprep.subr.mxu0 0.0
    %878 = vmatpush2.xpose.msra.mxu0 0.0
    %879 = vmatprep.subr.mxu0 0.0
    %880 = vmatpush2.xpose.msra.mxu0 0.0
    %881 = vmatprep.subr.mxu0 0.0
    %882 = vmatpush2.xpose.msra.mxu0 0.0
    %883 = vmatprep.subr.mxu0 0.0
    %884 = vmatpush2.xpose.msra.mxu0 0.0
    %885 = vmatprep.subr.mxu0 0.0
    %886 = vmatpush2.xpose.msra.mxu0 0.0
    %887 = vmatprep.mubr.f32.mxu0 0.0
    %888 = vmatmul.mubr.f32.gmra.mxu0 %v815
    %v889 = vpop.f32.mrf.mxu0
    %v890 = vadd.f32 0.0, %v889
    %v891 = vpop.f32.mrf.mxu0
    %892 = vmatprep.mubr.f32.mxu0 0.0
    %893 = vmatmul.mubr.f32.gmra.mxu0 %v817
    %v894 = vpop.f32.mrf.mxu0
    %v895 = vadd.f32 0.0, %v894
    %v896 = vpop.f32.mrf.mxu0
    %897 = vdwg.mxu0
    %v898 = vmul.f32 %v890, 0.25
    %v899 = vmul.f32 %v895, 0.25
    %v900 = vadd.f32 %v898, %v416
    %v901 = vadd.f32 %v899, %v417
    %v902 = vsel %vm521, %v900, -inf
    %903 = vmax.xlane.f32.xlu0 %v902
    %v904 = vpop.xlane.xlu0 %903
    %v905 = vsel %vm521, %v901, -inf
    %906 = vmax.xlane.f32.xlu0 %v905
    %v907 = vpop.xlane.xlu0 %906
    %v908 = vsub.f32 %v900, %v904
    %v909 = vsub.f32 %v901, %v907
    %v910 = vmul.f32 %v908, 1.442695
    %v911 = vpow.pop %v910
    %v912 = vmul.f32 %v909, 1.442695
    %v913 = vpow.pop %v912
    %v914 = vsel %vm521, %v911, 0.0
    %915 = vadd.xlane.f32.xlu0 %v914
    %v916 = vpop.xlane.xlu0 %915
    %v917 = vsel %vm521, %v913, 0.0
    %918 = vadd.xlane.f32.xlu0 %v917
    %v919 = vpop.xlane.xlu0 %918
    %v920 = vrcp.pop %v916
    %v921 = vrcp.pop %v919
    %v922 = vmul.f32 %v911, %v920
    %v923 = vmul.f32 %v913, %v921
    %924 = vrot.lane.b32.xlu0 %v502, 48
    %v925 = vpop.permute.xlu0 %924
    %926 = vrot.lane.b32.xlu0 %v507, 48
    %v927 = vpop.permute.xlu0 %926
    %v931 = vsel %vm521, %v922, 0
    %v934 = vsel %vm521, %v923, 0
    %936 = vmatprep.subr.mxu0 0.0
    %937 = vmatpush1.msra.mxu0 0.0
    %938 = vmatprep.subr.mxu0 0.0
    %939 = vmatpush1.msra.mxu0 0.0
    %940 = vmatprep.subr.mxu0 0.0
    %941 = vmatpush1.msra.mxu0 0.0
    %942 = vmatprep.subr.mxu0 0.0
    %943 = vmatpush1.msra.mxu0 0.0
    %944 = vmatprep.subr.mxu0 0.0
    %945 = vmatpush1.msra.mxu0 0.0
    %946 = vmatprep.subr.mxu0 0.0
    %947 = vmatpush1.msra.mxu0 0.0
    %948 = vmatprep.subr.mxu0 0.0
    %949 = vmatpush1.msra.mxu0 0.0
    %950 = vmatprep.subr.mxu0 0.0
    %951 = vmatpush1.msra.mxu0 0.0
    %952 = vmatprep.subr.mxu0 0.0
    %953 = vmatpush1.msra.mxu0 0.0
    %954 = vmatprep.subr.mxu0 0.0
    %955 = vmatpush1.msra.mxu0 0.0
    %956 = vmatprep.subr.mxu0 0.0
    %957 = vmatpush1.msra.mxu0 0.0
    %958 = vmatprep.subr.mxu0 0.0
    %959 = vmatpush1.msra.mxu0 0.0
    %960 = vmatprep.subr.mxu0 0.0
    %961 = vmatpush1.msra.mxu0 0.0
    %962 = vmatprep.subr.mxu0 0.0
    %963 = vmatpush1.msra.mxu0 0.0
    %964 = vmatprep.subr.mxu0 0.0
    %965 = vmatpush1.msra.mxu0 %v927
    %966 = vmatprep.subr.mxu0 0.0
    %967 = vmatpush1.msra.mxu0 %v925
    %968 = vmatprep.subr.mxu0 0.0
    %969 = vmatpush2.msra.mxu0 0.0
    %970 = vmatprep.subr.mxu0 0.0
    %971 = vmatpush2.msra.mxu0 0.0
    %972 = vmatprep.subr.mxu0 0.0
    %973 = vmatpush2.msra.mxu0 0.0
    %974 = vmatprep.subr.mxu0 0.0
    %975 = vmatpush2.msra.mxu0 0.0
    %976 = vmatprep.subr.mxu0 0.0
    %977 = vmatpush2.msra.mxu0 0.0
    %978 = vmatprep.subr.mxu0 0.0
    %979 = vmatpush2.msra.mxu0 0.0
    %980 = vmatprep.subr.mxu0 0.0
    %981 = vmatpush2.msra.mxu0 0.0
    %982 = vmatprep.subr.mxu0 0.0
    %983 = vmatpush2.msra.mxu0 0.0
    %984 = vmatprep.subr.mxu0 0.0
    %985 = vmatpush2.msra.mxu0 0.0
    %986 = vmatprep.subr.mxu0 0.0
    %987 = vmatpush2.msra.mxu0 0.0
    %988 = vmatprep.subr.mxu0 0.0
    %989 = vmatpush2.msra.mxu0 0.0
    %990 = vmatprep.subr.mxu0 0.0
    %991 = vmatpush2.msra.mxu0 0.0
    %992 = vmatprep.subr.mxu0 0.0
    %993 = vmatpush2.msra.mxu0 0.0
    %994 = vmatprep.subr.mxu0 0.0
    %995 = vmatpush2.msra.mxu0 0.0
    %996 = vmatprep.subr.mxu0 0.0
    %997 = vmatpush2.msra.mxu0 0.0
    %998 = vmatprep.subr.mxu0 0.0
    %999 = vmatpush2.msra.mxu0 0.0
    %1000 = vmatprep.mubr.f32.mxu0 0.0
    %1001 = vmatmul.mubr.f32.gmra.mxu0 %v931
    %v1002 = vpop.f32.mrf.mxu0
    %v1003 = vadd.f32 0.0, %v1002
    %v1004 = vpop.f32.mrf.mxu0
    %1005 = vmatprep.mubr.f32.mxu0 0.0
    %1006 = vmatmul.mubr.f32.gmra.mxu0 %v934
    %v1007 = vpop.f32.mrf.mxu0
    %v1008 = vadd.f32 0.0, %v1007
    %v1009 = vpop.f32.mrf.mxu0
    %1010 = vdwg.mxu0
    %v1012 = vsel %vm521, %v1003, 0
    %v1015 = vsel %vm521, %v1008, 0
    %1017 = vmatprep.subr.mxu0 0.0
    %1018 = vmatpush1.msra.mxu0 0.0
    %1019 = vmatprep.subr.mxu0 0.0
    %1020 = vmatpush1.msra.mxu0 0.0
    %1021 = vmatprep.subr.mxu0 0.0
    %1022 = vmatpush1.msra.mxu0 0.0
    %1023 = vmatprep.subr.mxu0 0.0
    %1024 = vmatpush1.msra.mxu0 0.0
    %1025 = vmatprep.subr.mxu0 0.0
    %1026 = vmatpush1.msra.mxu0 0.0
    %1027 = vmatprep.subr.mxu0 0.0
    %1028 = vmatpush1.msra.mxu0 0.0
    %1029 = vmatprep.subr.mxu0 0.0
    %1030 = vmatpush1.msra.mxu0 0.0
    %1031 = vmatprep.subr.mxu0 0.0
    %1032 = vmatpush1.msra.mxu0 0.0
    %1033 = vmatprep.subr.mxu0 0.0
    %1034 = vmatpush1.msra.mxu0 0.0
    %1035 = vmatprep.subr.mxu0 0.0
    %1036 = vmatpush1.msra.mxu0 0.0
    %1037 = vmatprep.subr.mxu0 0.0
    %1038 = vmatpush1.msra.mxu0 0.0
    %1039 = vmatprep.subr.mxu0 0.0
    %1040 = vmatpush1.msra.mxu0 0.0
    %1041 = vmatprep.subr.mxu0 0.0
    %1042 = vmatpush1.msra.mxu0 0.0
    %1043 = vmatprep.subr.mxu0 0.0
    %1044 = vmatpush1.msra.mxu0 0.0
    %1045 = vmatprep.subr.mxu0 0.0
    %1046 = vmatpush1.msra.mxu0 %v513
    %1047 = vmatprep.subr.mxu0 0.0
    %1048 = vmatpush1.msra.mxu0 %v512
    %1049 = vmatprep.subr.mxu0 0.0
    %1050 = vmatpush2.msra.mxu0 0.0
    %1051 = vmatprep.subr.mxu0 0.0
    %1052 = vmatpush2.msra.mxu0 0.0
    %1053 = vmatprep.subr.mxu0 0.0
    %1054 = vmatpush2.msra.mxu0 0.0
    %1055 = vmatprep.subr.mxu0 0.0
    %1056 = vmatpush2.msra.mxu0 0.0
    %1057 = vmatprep.subr.mxu0 0.0
    %1058 = vmatpush2.msra.mxu0 0.0
    %1059 = vmatprep.subr.mxu0 0.0
    %1060 = vmatpush2.msra.mxu0 0.0
    %1061 = vmatprep.subr.mxu0 0.0
    %1062 = vmatpush2.msra.mxu0 0.0
    %1063 = vmatprep.subr.mxu0 0.0
    %1064 = vmatpush2.msra.mxu0 0.0
    %1065 = vmatprep.subr.mxu0 0.0
    %1066 = vmatpush2.msra.mxu0 0.0
    %1067 = vmatprep.subr.mxu0 0.0
    %1068 = vmatpush2.msra.mxu0 0.0
    %1069 = vmatprep.subr.mxu0 0.0
    %1070 = vmatpush2.msra.mxu0 0.0
    %1071 = vmatprep.subr.mxu0 0.0
    %1072 = vmatpush2.msra.mxu0 0.0
    %1073 = vmatprep.subr.mxu0 0.0
    %1074 = vmatpush2.msra.mxu0 0.0
    %1075 = vmatprep.subr.mxu0 0.0
    %1076 = vmatpush2.msra.mxu0 0.0
    %1077 = vmatprep.subr.mxu0 0.0
    %1078 = vmatpush2.msra.mxu0 0.0
    %1079 = vmatprep.subr.mxu0 0.0
    %1080 = vmatpush2.msra.mxu0 0.0
    %1081 = vmatprep.mubr.f32.mxu0 0.0
    %1082 = vmatmul.mubr.f32.gmra.mxu0 %v1012
    %v1083 = vpop.f32.mrf.mxu0
    %v1084 = vadd.f32 0.0, %v1083
    %v1085 = vpop.f32.mrf.mxu0
    %1086 = vmatprep.mubr.f32.mxu0 0.0
    %1087 = vmatmul.mubr.f32.gmra.mxu0 %v1015
    %v1088 = vpop.f32.mrf.mxu0
    %v1089 = vadd.f32 0.0, %v1088
    %v1090 = vpop.f32.mrf.mxu0
    %1091 = vdwg.mxu0
    %v1092 = vadd.f32 %v805, %v1084
    %v1093 = vadd.f32 %v806, %v1089
    %v1094 = vadd.f32 %v1092, %v414
    %v1095 = vadd.f32 %v1093, %v415
    %v1096 = vld [vmem:[%s13] sm:$0x1]
    %v1097 = vld [vmem:[%s14] sm:$0x1]
    %v1098 = vsel %vm372, %v1094, 0.0
    %1099 = vadd.xlane.f32.xlu0 %v1098
    %v1100 = vpop.xlane.xlu0 %1099
    %v1101 = vsel %vm372, %v1095, 0.0
    %1102 = vadd.xlane.f32.xlu0 %v1101
    %v1103 = vpop.xlane.xlu0 %1102
    %v1104 = vmul.f32 %v1100, %v379
    %v1105 = vmul.f32 %v1103, %v379
    %v1106 = vsub.f32 %v1094, %v1104
    %v1107 = vsub.f32 %v1095, %v1105
    %v1108 = vmul.f32 %v1106, %v1106
    %v1109 = vmul.f32 %v1107, %v1107
    %v1110 = vsel %vm372, %v1108, 0.0
    %1111 = vadd.xlane.f32.xlu0 %v1110
    %v1112 = vpop.xlane.xlu0 %1111
    %v1113 = vsel %vm372, %v1109, 0.0
    %1114 = vadd.xlane.f32.xlu0 %v1113
    %v1115 = vpop.xlane.xlu0 %1114
    %v1116 = vmul.f32 %v1112, %v379
    %v1117 = vmul.f32 %v1115, %v379
    %v1118 = vadd.f32 %v1116, 1e-06
    %v1119 = vadd.f32 %v1117, 1e-06
    %v1120 = vrsqrt.pop %v1118
    %v1121 = vrsqrt.pop %v1119
    %v1122 = vmul.f32 %v1106, %v1120
    %v1123 = vmul.f32 %v1107, %v1121
    %v1125 = vlaneseq
    %v1126 = vshrl.u32 %v1125, 7
    %v1127 = vsub.s32 0, %v1126
    %v1128 = vrot.slane %v1096, %v1127
    %v1130 = vmul.f32 %v1122, %v1128
    %v1131 = vmul.f32 %v1123, %v1128
    %v1133 = vlaneseq
    %v1134 = vshrl.u32 %v1133, 7
    %v1135 = vsub.s32 0, %v1134
    %v1136 = vrot.slane %v1097, %v1135
    %v1138 = vadd.f32 %v1130, %v1136
    %v1139 = vadd.f32 %v1131, %v1136
    %v1140 = vld [vmem:[%s15] sm:$0xff]
    %v1141 = vld [vmem:[%s15 + $0x8] sm:$0xff]
    %v1142 = vld [vmem:[%s15 + $0x10] sm:$0xff]
    %v1143 = vld [vmem:[%s15 + $0x18] sm:$0xff]
    %v1144 = vld [vmem:[%s16] sm:$0x1]
    %v1146 = vlaneseq
    %v1147 = vshrl.u32 %v1146, 7
    %v1148 = vsub.s32 0, %v1147
    %v1149 = vrot.slane %v1144, %v1148
    %v1152 = vsel %vm372, %v1138, 0
    %v1155 = vsel %vm372, %v1139, 0
    %1157 = vmatprep.subr.mxu0 0.0
    %1158 = vmatpush1.msra.mxu0 0.0
    %1159 = vmatprep.subr.mxu0 0.0
    %1160 = vmatpush1.msra.mxu0 0.0
    %1161 = vmatprep.subr.mxu0 0.0
    %1162 = vmatpush1.msra.mxu0 0.0
    %1163 = vmatprep.subr.mxu0 0.0
    %1164 = vmatpush1.msra.mxu0 0.0
    %1165 = vmatprep.subr.mxu0 0.0
    %1166 = vmatpush1.msra.mxu0 0.0
    %1167 = vmatprep.subr.mxu0 0.0
    %1168 = vmatpush1.msra.mxu0 0.0
    %1169 = vmatprep.subr.mxu0 0.0
    %1170 = vmatpush1.msra.mxu0 0.0
    %1171 = vmatprep.subr.mxu0 0.0
    %1172 = vmatpush1.msra.mxu0 0.0
    %1173 = vmatprep.subr.mxu0 0.0
    %1174 = vmatpush1.msra.mxu0 0.0
    %1175 = vmatprep.subr.mxu0 0.0
    %1176 = vmatpush1.msra.mxu0 0.0
    %1177 = vmatprep.subr.mxu0 0.0
    %1178 = vmatpush1.msra.mxu0 0.0
    %1179 = vmatprep.subr.mxu0 0.0
    %1180 = vmatpush1.msra.mxu0 0.0
    %1181 = vmatprep.subr.mxu0 0.0
    %1182 = vmatpush1.msra.mxu0 %v1143
    %1183 = vmatprep.subr.mxu0 0.0
    %1184 = vmatpush1.msra.mxu0 %v1142
    %1185 = vmatprep.subr.mxu0 0.0
    %1186 = vmatpush1.msra.mxu0 %v1141
    %1187 = vmatprep.subr.mxu0 0.0
    %1188 = vmatpush1.msra.mxu0 %v1140
    %1189 = vmatprep.subr.mxu0 0.0
    %1190 = vmatpush2.msra.mxu0 0.0
    %1191 = vmatprep.subr.mxu0 0.0
    %1192 = vmatpush2.msra.mxu0 0.0
    %1193 = vmatprep.subr.mxu0 0.0
    %1194 = vmatpush2.msra.mxu0 0.0
    %1195 = vmatprep.subr.mxu0 0.0
    %1196 = vmatpush2.msra.mxu0 0.0
    %1197 = vmatprep.subr.mxu0 0.0
    %1198 = vmatpush2.msra.mxu0 0.0
    %1199 = vmatprep.subr.mxu0 0.0
    %1200 = vmatpush2.msra.mxu0 0.0
    %1201 = vmatprep.subr.mxu0 0.0
    %1202 = vmatpush2.msra.mxu0 0.0
    %1203 = vmatprep.subr.mxu0 0.0
    %1204 = vmatpush2.msra.mxu0 0.0
    %1205 = vmatprep.subr.mxu0 0.0
    %1206 = vmatpush2.msra.mxu0 0.0
    %1207 = vmatprep.subr.mxu0 0.0
    %1208 = vmatpush2.msra.mxu0 0.0
    %1209 = vmatprep.subr.mxu0 0.0
    %1210 = vmatpush2.msra.mxu0 0.0
    %1211 = vmatprep.subr.mxu0 0.0
    %1212 = vmatpush2.msra.mxu0 0.0
    %1213 = vmatprep.subr.mxu0 0.0
    %1214 = vmatpush2.msra.mxu0 0.0
    %1215 = vmatprep.subr.mxu0 0.0
    %1216 = vmatpush2.msra.mxu0 0.0
    %1217 = vmatprep.subr.mxu0 0.0
    %1218 = vmatpush2.msra.mxu0 0.0
    %1219 = vmatprep.subr.mxu0 0.0
    %1220 = vmatpush2.msra.mxu0 0.0
    %1221 = vmatprep.mubr.f32.mxu0 0.0
    %1222 = vmatmul.mubr.f32.gmra.mxu0 %v1152
    %v1223 = vpop.f32.mrf.mxu0
    %v1224 = vadd.f32 %v1149, %v1223
    %v1225 = vpop.f32.mrf.mxu0
    %1226 = vmatprep.mubr.f32.mxu0 0.0
    %1227 = vmatmul.mubr.f32.gmra.mxu0 %v1155
    %v1228 = vpop.f32.mrf.mxu0
    %v1229 = vadd.f32 %v1149, %v1228
    %v1230 = vpop.f32.mrf.mxu0
    %1231 = vdwg.mxu0
    %v1232 = vmul.f32 %v1224, 0.5
    %v1233 = vmul.f32 %v1229, 0.5
    %v1234 = vmul.f32 %v1224, 0.70710677
    %v1235 = vmul.f32 %v1229, 0.70710677
    %v1236 = verf.f32.pop %v1234
    %v1237 = verf.f32.pop %v1235
    %v1238 = vadd.f32 %v1236, 1.0
    %v1239 = vadd.f32 %v1237, 1.0
    %v1240 = vmul.f32 %v1232, %v1238
    %v1241 = vmul.f32 %v1233, %v1239
    %v1242 = vld [vmem:[%s17] sm:$0xff]
    %v1243 = vld [vmem:[%s17 + $0x8] sm:$0xff]
    %v1244 = vld [vmem:[%s17 + $0x10] sm:$0xff]
    %v1245 = vld [vmem:[%s17 + $0x18] sm:$0xff]
    %v1246 = vld [vmem:[%s17 + $0x20] sm:$0xff]
    %v1247 = vld [vmem:[%s17 + $0x28] sm:$0xff]
    %v1248 = vld [vmem:[%s17 + $0x30] sm:$0xff]
    %v1249 = vld [vmem:[%s17 + $0x38] sm:$0xff]
    %v1250 = vld [vmem:[%s18] sm:$0x1]
    %v1252 = vlaneseq
    %v1253 = vshrl.u32 %v1252, 7
    %v1254 = vsub.s32 0, %v1253
    %v1255 = vrot.slane %v1250, %v1254
    %v1258 = vsel %vm190, %v1240, 0
    %v1261 = vsel %vm190, %v1241, 0
    %1263 = vmatprep.subr.mxu0 0.0
    %1264 = vmatpush1.msra.mxu0 0.0
    %1265 = vmatprep.subr.mxu0 0.0
    %1266 = vmatpush1.msra.mxu0 0.0
    %1267 = vmatprep.subr.mxu0 0.0
    %1268 = vmatpush1.msra.mxu0 0.0
    %1269 = vmatprep.subr.mxu0 0.0
    %1270 = vmatpush1.msra.mxu0 0.0
    %1271 = vmatprep.subr.mxu0 0.0
    %1272 = vmatpush1.msra.mxu0 0.0
    %1273 = vmatprep.subr.mxu0 0.0
    %1274 = vmatpush1.msra.mxu0 0.0
    %1275 = vmatprep.subr.mxu0 0.0
    %1276 = vmatpush1.msra.mxu0 0.0
    %1277 = vmatprep.subr.mxu0 0.0
    %1278 = vmatpush1.msra.mxu0 0.0
    %1279 = vmatprep.subr.mxu0 0.0
    %1280 = vmatpush1.msra.mxu0 %v1249
    %1281 = vmatprep.subr.mxu0 0.0
    %1282 = vmatpush1.msra.mxu0 %v1248
    %1283 = vmatprep.subr.mxu0 0.0
    %1284 = vmatpush1.msra.mxu0 %v1247
    %1285 = vmatprep.subr.mxu0 0.0
    %1286 = vmatpush1.msra.mxu0 %v1246
    %1287 = vmatprep.subr.mxu0 0.0
    %1288 = vmatpush1.msra.mxu0 %v1245
    %1289 = vmatprep.subr.mxu0 0.0
    %1290 = vmatpush1.msra.mxu0 %v1244
    %1291 = vmatprep.subr.mxu0 0.0
    %1292 = vmatpush1.msra.mxu0 %v1243
    %1293 = vmatprep.subr.mxu0 0.0
    %1294 = vmatpush1.msra.mxu0 %v1242
    %1295 = vmatprep.subr.mxu0 0.0
    %1296 = vmatpush2.msra.mxu0 0.0
    %1297 = vmatprep.subr.mxu0 0.0
    %1298 = vmatpush2.msra.mxu0 0.0
    %1299 = vmatprep.subr.mxu0 0.0
    %1300 = vmatpush2.msra.mxu0 0.0
    %1301 = vmatprep.subr.mxu0 0.0
    %1302 = vmatpush2.msra.mxu0 0.0
    %1303 = vmatprep.subr.mxu0 0.0
    %1304 = vmatpush2.msra.mxu0 0.0
    %1305 = vmatprep.subr.mxu0 0.0
    %1306 = vmatpush2.msra.mxu0 0.0
    %1307 = vmatprep.subr.mxu0 0.0
    %1308 = vmatpush2.msra.mxu0 0.0
    %1309 = vmatprep.subr.mxu0 0.0
    %1310 = vmatpush2.msra.mxu0 0.0
    %1311 = vmatprep.subr.mxu0 0.0
    %1312 = vmatpush2.msra.mxu0 0.0
    %1313 = vmatprep.subr.mxu0 0.0
    %1314 = vmatpush2.msra.mxu0 0.0
    %1315 = vmatprep.subr.mxu0 0.0
    %1316 = vmatpush2.msra.mxu0 0.0
    %1317 = vmatprep.subr.mxu0 0.0
    %1318 = vmatpush2.msra.mxu0 0.0
    %1319 = vmatprep.subr.mxu0 0.0
    %1320 = vmatpush2.msra.mxu0 0.0
    %1321 = vmatprep.subr.mxu0 0.0
    %1322 = vmatpush2.msra.mxu0 0.0
    %1323 = vmatprep.subr.mxu0 0.0
    %1324 = vmatpush2.msra.mxu0 0.0
    %1325 = vmatprep.subr.mxu0 0.0
    %1326 = vmatpush2.msra.mxu0 0.0
    %1327 = vmatprep.mubr.f32.mxu0 0.0
    %1328 = vmatmul.mubr.f32.gmra.mxu0 %v1258
    %v1329 = vpop.f32.mrf.mxu0
    %v1330 = vadd.f32 %v1255, %v1329
    %v1331 = vpop.f32.mrf.mxu0
    %1332 = vmatprep.mubr.f32.mxu0 0.0
    %1333 = vmatmul.mubr.f32.gmra.mxu0 %v1261
    %v1334 = vpop.f32.mrf.mxu0
    %v1335 = vadd.f32 %v1255, %v1334
    %v1336 = vpop.f32.mrf.mxu0
    %1337 = vdwg.mxu0
    %v1338 = vadd.f32 %v1330, %v1138
    %v1339 = vadd.f32 %v1335, %v1139
    %v1340 = vld [vmem:[%s19] sm:$0x1]
    %v1341 = vld [vmem:[%s20] sm:$0x1]
    %v1342 = vsel %vm372, %v1338, 0.0
    %1343 = vadd.xlane.f32.xlu0 %v1342
    %v1344 = vpop.xlane.xlu0 %1343
    %v1345 = vsel %vm372, %v1339, 0.0
    %1346 = vadd.xlane.f32.xlu0 %v1345
    %v1347 = vpop.xlane.xlu0 %1346
    %v1348 = vmul.f32 %v1344, %v379
    %v1349 = vmul.f32 %v1347, %v379
    %v1350 = vsub.f32 %v1338, %v1348
    %v1351 = vsub.f32 %v1339, %v1349
    %v1352 = vmul.f32 %v1350, %v1350
    %v1353 = vmul.f32 %v1351, %v1351
    %v1354 = vsel %vm372, %v1352, 0.0
    %1355 = vadd.xlane.f32.xlu0 %v1354
    %v1356 = vpop.xlane.xlu0 %1355
    %v1357 = vsel %vm372, %v1353, 0.0
    %1358 = vadd.xlane.f32.xlu0 %v1357
    %v1359 = vpop.xlane.xlu0 %1358
    %v1360 = vmul.f32 %v1356, %v379
    %v1361 = vmul.f32 %v1359, %v379
    %v1362 = vadd.f32 %v1360, 1e-06
    %v1363 = vadd.f32 %v1361, 1e-06
    %v1364 = vrsqrt.pop %v1362
    %v1365 = vrsqrt.pop %v1363
    %v1366 = vmul.f32 %v1350, %v1364
    %v1367 = vmul.f32 %v1351, %v1365
    %v1369 = vlaneseq
    %v1370 = vshrl.u32 %v1369, 7
    %v1371 = vsub.s32 0, %v1370
    %v1372 = vrot.slane %v1340, %v1371
    %v1374 = vmul.f32 %v1366, %v1372
    %v1375 = vmul.f32 %v1367, %v1372
    %v1377 = vlaneseq
    %v1378 = vshrl.u32 %v1377, 7
    %v1379 = vsub.s32 0, %v1378
    %v1380 = vrot.slane %v1341, %v1379
    %v1382 = vadd.f32 %v1374, %v1380
    %v1383 = vadd.f32 %v1375, %v1380
    %s1384 = scalar_lea.vmem %s9, 32
    %v1385 = vld [vmem:[%s1384] sm:$0xff]
    %v1386 = vld [vmem:[%s1384 + $0x8] sm:$0xff]
    %v1387 = vld [vmem:[%s1384 + $0x10] sm:$0xff]
    %v1388 = vld [vmem:[%s1384 + $0x18] sm:$0xff]
    %s1389 = scalar_lea.vmem %s10, 1
    %v1390 = vld [vmem:[%s1389] sm:$0x1]
    %v1392 = vlaneseq
    %v1393 = vshrl.u32 %v1392, 7
    %v1394 = vsub.s32 0, %v1393
    %v1395 = vrot.slane %v1390, %v1394
    %v1398 = vsel %vm372, %v1382, 0
    %v1401 = vsel %vm372, %v1383, 0
    %1403 = vmatprep.subr.mxu0 0.0
    %1404 = vmatpush1.msra.mxu0 0.0
    %1405 = vmatprep.subr.mxu0 0.0
    %1406 = vmatpush1.msra.mxu0 0.0
    %1407 = vmatprep.subr.mxu0 0.0
    %1408 = vmatpush1.msra.mxu0 0.0
    %1409 = vmatprep.subr.mxu0 0.0
    %1410 = vmatpush1.msra.mxu0 0.0
    %1411 = vmatprep.subr.mxu0 0.0
    %1412 = vmatpush1.msra.mxu0 0.0
    %1413 = vmatprep.subr.mxu0 0.0
    %1414 = vmatpush1.msra.mxu0 0.0
    %1415 = vmatprep.subr.mxu0 0.0
    %1416 = vmatpush1.msra.mxu0 0.0
    %1417 = vmatprep.subr.mxu0 0.0
    %1418 = vmatpush1.msra.mxu0 0.0
    %1419 = vmatprep.subr.mxu0 0.0
    %1420 = vmatpush1.msra.mxu0 0.0
    %1421 = vmatprep.subr.mxu0 0.0
    %1422 = vmatpush1.msra.mxu0 0.0
    %1423 = vmatprep.subr.mxu0 0.0
    %1424 = vmatpush1.msra.mxu0 0.0
    %1425 = vmatprep.subr.mxu0 0.0
    %1426 = vmatpush1.msra.mxu0 0.0
    %1427 = vmatprep.subr.mxu0 0.0
    %1428 = vmatpush1.msra.mxu0 %v1388
    %1429 = vmatprep.subr.mxu0 0.0
    %1430 = vmatpush1.msra.mxu0 %v1387
    %1431 = vmatprep.subr.mxu0 0.0
    %1432 = vmatpush1.msra.mxu0 %v1386
    %1433 = vmatprep.subr.mxu0 0.0
    %1434 = vmatpush1.msra.mxu0 %v1385
    %1435 = vmatprep.subr.mxu0 0.0
    %1436 = vmatpush2.msra.mxu0 0.0
    %1437 = vmatprep.subr.mxu0 0.0
    %1438 = vmatpush2.msra.mxu0 0.0
    %1439 = vmatprep.subr.mxu0 0.0
    %1440 = vmatpush2.msra.mxu0 0.0
    %1441 = vmatprep.subr.mxu0 0.0
    %1442 = vmatpush2.msra.mxu0 0.0
    %1443 = vmatprep.subr.mxu0 0.0
    %1444 = vmatpush2.msra.mxu0 0.0
    %1445 = vmatprep.subr.mxu0 0.0
    %1446 = vmatpush2.msra.mxu0 0.0
    %1447 = vmatprep.subr.mxu0 0.0
    %1448 = vmatpush2.msra.mxu0 0.0
    %1449 = vmatprep.subr.mxu0 0.0
    %1450 = vmatpush2.msra.mxu0 0.0
    %1451 = vmatprep.subr.mxu0 0.0
    %1452 = vmatpush2.msra.mxu0 0.0
    %1453 = vmatprep.subr.mxu0 0.0
    %1454 = vmatpush2.msra.mxu0 0.0
    %1455 = vmatprep.subr.mxu0 0.0
    %1456 = vmatpush2.msra.mxu0 0.0
    %1457 = vmatprep.subr.mxu0 0.0
    %1458 = vmatpush2.msra.mxu0 0.0
    %1459 = vmatprep.subr.mxu0 0.0
    %1460 = vmatpush2.msra.mxu0 0.0
    %1461 = vmatprep.subr.mxu0 0.0
    %1462 = vmatpush2.msra.mxu0 0.0
    %1463 = vmatprep.subr.mxu0 0.0
    %1464 = vmatpush2.msra.mxu0 0.0
    %1465 = vmatprep.subr.mxu0 0.0
    %1466 = vmatpush2.msra.mxu0 0.0
    %1467 = vmatprep.mubr.f32.mxu0 0.0
    %1468 = vmatmul.mubr.f32.gmra.mxu0 %v1398
    %v1469 = vpop.f32.mrf.mxu0
    %v1470 = vadd.f32 %v1395, %v1469
    %v1471 = vpop.f32.mrf.mxu0
    %1472 = vmatprep.mubr.f32.mxu0 0.0
    %1473 = vmatmul.mubr.f32.gmra.mxu0 %v1401
    %v1474 = vpop.f32.mrf.mxu0
    %v1475 = vadd.f32 %v1395, %v1474
    %v1476 = vpop.f32.mrf.mxu0
    %1477 = vdwg.mxu0
    %s1478 = scalar_lea.vmem %s11, 32
    %v1479 = vld [vmem:[%s1478] sm:$0xff]
    %v1480 = vld [vmem:[%s1478 + $0x8] sm:$0xff]
    %v1481 = vld [vmem:[%s1478 + $0x10] sm:$0xff]
    %v1482 = vld [vmem:[%s1478 + $0x18] sm:$0xff]
    %s1483 = scalar_lea.vmem %s12, 1
    %v1484 = vld [vmem:[%s1483] sm:$0x1]
    %1487 = vrot.lane.b32.xlu0 %v1470, 96
    %v1488 = vpop.permute.xlu0 %1487
    %1489 = vrot.lane.b32.xlu0 %v1475, 96
    %v1490 = vpop.permute.xlu0 %1489
    %v1491 = vsel %vm521, %v1470, 0
    %v1493 = vsel %vm521, %v1475, 0
    %v1495 = vsel %vm521, %v1488, 0
    %v1497 = vsel %vm521, %v1490, 0
    %1499 = vmatprep.subr.mxu0 0.0
    %1500 = vmatpush1.xpose.msra.mxu0 0.0
    %1501 = vmatprep.subr.mxu0 0.0
    %1502 = vmatpush1.xpose.msra.mxu0 0.0
    %1503 = vmatprep.subr.mxu0 0.0
    %1504 = vmatpush1.xpose.msra.mxu0 0.0
    %1505 = vmatprep.subr.mxu0 0.0
    %1506 = vmatpush1.xpose.msra.mxu0 0.0
    %1507 = vmatprep.subr.mxu0 0.0
    %1508 = vmatpush1.xpose.msra.mxu0 0.0
    %1509 = vmatprep.subr.mxu0 0.0
    %1510 = vmatpush1.xpose.msra.mxu0 0.0
    %1511 = vmatprep.subr.mxu0 0.0
    %1512 = vmatpush1.xpose.msra.mxu0 0.0
    %1513 = vmatprep.subr.mxu0 0.0
    %1514 = vmatpush1.xpose.msra.mxu0 0.0
    %1515 = vmatprep.subr.mxu0 0.0
    %1516 = vmatpush1.xpose.msra.mxu0 0.0
    %1517 = vmatprep.subr.mxu0 0.0
    %1518 = vmatpush1.xpose.msra.mxu0 0.0
    %1519 = vmatprep.subr.mxu0 0.0
    %1520 = vmatpush1.xpose.msra.mxu0 0.0
    %1521 = vmatprep.subr.mxu0 0.0
    %1522 = vmatpush1.xpose.msra.mxu0 0.0
    %1523 = vmatprep.subr.mxu0 0.0
    %1524 = vmatpush1.xpose.msra.mxu0 0.0
    %1525 = vmatprep.subr.mxu0 0.0
    %1526 = vmatpush1.xpose.msra.mxu0 0.0
    %1527 = vmatprep.subr.mxu0 0.0
    %1528 = vmatpush1.xpose.msra.mxu0 %v1497
    %1529 = vmatprep.subr.mxu0 0.0
    %1530 = vmatpush1.xpose.msra.mxu0 %v1495
    %1531 = vmatprep.subr.mxu0 0.0
    %1532 = vmatpush2.xpose.msra.mxu0 0.0
    %1533 = vmatprep.subr.mxu0 0.0
    %1534 = vmatpush2.xpose.msra.mxu0 0.0
    %1535 = vmatprep.subr.mxu0 0.0
    %1536 = vmatpush2.xpose.msra.mxu0 0.0
    %1537 = vmatprep.subr.mxu0 0.0
    %1538 = vmatpush2.xpose.msra.mxu0 0.0
    %1539 = vmatprep.subr.mxu0 0.0
    %1540 = vmatpush2.xpose.msra.mxu0 0.0
    %1541 = vmatprep.subr.mxu0 0.0
    %1542 = vmatpush2.xpose.msra.mxu0 0.0
    %1543 = vmatprep.subr.mxu0 0.0
    %1544 = vmatpush2.xpose.msra.mxu0 0.0
    %1545 = vmatprep.subr.mxu0 0.0
    %1546 = vmatpush2.xpose.msra.mxu0 0.0
    %1547 = vmatprep.subr.mxu0 0.0
    %1548 = vmatpush2.xpose.msra.mxu0 0.0
    %1549 = vmatprep.subr.mxu0 0.0
    %1550 = vmatpush2.xpose.msra.mxu0 0.0
    %1551 = vmatprep.subr.mxu0 0.0
    %1552 = vmatpush2.xpose.msra.mxu0 0.0
    %1553 = vmatprep.subr.mxu0 0.0
    %1554 = vmatpush2.xpose.msra.mxu0 0.0
    %1555 = vmatprep.subr.mxu0 0.0
    %1556 = vmatpush2.xpose.msra.mxu0 0.0
    %1557 = vmatprep.subr.mxu0 0.0
    %1558 = vmatpush2.xpose.msra.mxu0 0.0
    %1559 = vmatprep.subr.mxu0 0.0
    %1560 = vmatpush2.xpose.msra.mxu0 0.0
    %1561 = vmatprep.subr.mxu0 0.0
    %1562 = vmatpush2.xpose.msra.mxu0 0.0
    %1563 = vmatprep.mubr.f32.mxu0 0.0
    %1564 = vmatmul.mubr.f32.gmra.mxu0 %v1491
    %v1565 = vpop.f32.mrf.mxu0
    %v1566 = vadd.f32 0.0, %v1565
    %v1567 = vpop.f32.mrf.mxu0
    %1568 = vmatprep.mubr.f32.mxu0 0.0
    %1569 = vmatmul.mubr.f32.gmra.mxu0 %v1493
    %v1570 = vpop.f32.mrf.mxu0
    %v1571 = vadd.f32 0.0, %v1570
    %v1572 = vpop.f32.mrf.mxu0
    %1573 = vdwg.mxu0
    %v1574 = vmul.f32 %v1566, 0.25
    %v1575 = vmul.f32 %v1571, 0.25
    %v1576 = vadd.f32 %v1574, %v416
    %v1577 = vadd.f32 %v1575, %v417
    %v1578 = vsel %vm521, %v1576, -inf
    %1579 = vmax.xlane.f32.xlu0 %v1578
    %v1580 = vpop.xlane.xlu0 %1579
    %v1581 = vsel %vm521, %v1577, -inf
    %1582 = vmax.xlane.f32.xlu0 %v1581
    %v1583 = vpop.xlane.xlu0 %1582
    %v1584 = vsub.f32 %v1576, %v1580
    %v1585 = vsub.f32 %v1577, %v1583
    %v1586 = vmul.f32 %v1584, 1.442695
    %v1587 = vpow.pop %v1586
    %v1588 = vmul.f32 %v1585, 1.442695
    %v1589 = vpow.pop %v1588
    %v1590 = vsel %vm521, %v1587, 0.0
    %1591 = vadd.xlane.f32.xlu0 %v1590
    %v1592 = vpop.xlane.xlu0 %1591
    %v1593 = vsel %vm521, %v1589, 0.0
    %1594 = vadd.xlane.f32.xlu0 %v1593
    %v1595 = vpop.xlane.xlu0 %1594
    %v1596 = vrcp.pop %v1592
    %v1597 = vrcp.pop %v1595
    %v1598 = vmul.f32 %v1587, %v1596
    %v1599 = vmul.f32 %v1589, %v1597
    %1600 = vrot.lane.b32.xlu0 %v1470, 64
    %v1601 = vpop.permute.xlu0 %1600
    %1602 = vrot.lane.b32.xlu0 %v1475, 64
    %v1603 = vpop.permute.xlu0 %1602
    %v1607 = vsel %vm521, %v1598, 0
    %v1610 = vsel %vm521, %v1599, 0
    %1612 = vmatprep.subr.mxu0 0.0
    %1613 = vmatpush1.msra.mxu0 0.0
    %1614 = vmatprep.subr.mxu0 0.0
    %1615 = vmatpush1.msra.mxu0 0.0
    %1616 = vmatprep.subr.mxu0 0.0
    %1617 = vmatpush1.msra.mxu0 0.0
    %1618 = vmatprep.subr.mxu0 0.0
    %1619 = vmatpush1.msra.mxu0 0.0
    %1620 = vmatprep.subr.mxu0 0.0
    %1621 = vmatpush1.msra.mxu0 0.0
    %1622 = vmatprep.subr.mxu0 0.0
    %1623 = vmatpush1.msra.mxu0 0.0
    %1624 = vmatprep.subr.mxu0 0.0
    %1625 = vmatpush1.msra.mxu0 0.0
    %1626 = vmatprep.subr.mxu0 0.0
    %1627 = vmatpush1.msra.mxu0 0.0
    %1628 = vmatprep.subr.mxu0 0.0
    %1629 = vmatpush1.msra.mxu0 0.0
    %1630 = vmatprep.subr.mxu0 0.0
    %1631 = vmatpush1.msra.mxu0 0.0
    %1632 = vmatprep.subr.mxu0 0.0
    %1633 = vmatpush1.msra.mxu0 0.0
    %1634 = vmatprep.subr.mxu0 0.0
    %1635 = vmatpush1.msra.mxu0 0.0
    %1636 = vmatprep.subr.mxu0 0.0
    %1637 = vmatpush1.msra.mxu0 0.0
    %1638 = vmatprep.subr.mxu0 0.0
    %1639 = vmatpush1.msra.mxu0 0.0
    %1640 = vmatprep.subr.mxu0 0.0
    %1641 = vmatpush1.msra.mxu0 %v1603
    %1642 = vmatprep.subr.mxu0 0.0
    %1643 = vmatpush1.msra.mxu0 %v1601
    %1644 = vmatprep.subr.mxu0 0.0
    %1645 = vmatpush2.msra.mxu0 0.0
    %1646 = vmatprep.subr.mxu0 0.0
    %1647 = vmatpush2.msra.mxu0 0.0
    %1648 = vmatprep.subr.mxu0 0.0
    %1649 = vmatpush2.msra.mxu0 0.0
    %1650 = vmatprep.subr.mxu0 0.0
    %1651 = vmatpush2.msra.mxu0 0.0
    %1652 = vmatprep.subr.mxu0 0.0
    %1653 = vmatpush2.msra.mxu0 0.0
    %1654 = vmatprep.subr.mxu0 0.0
    %1655 = vmatpush2.msra.mxu0 0.0
    %1656 = vmatprep.subr.mxu0 0.0
    %1657 = vmatpush2.msra.mxu0 0.0
    %1658 = vmatprep.subr.mxu0 0.0
    %1659 = vmatpush2.msra.mxu0 0.0
    %1660 = vmatprep.subr.mxu0 0.0
    %1661 = vmatpush2.msra.mxu0 0.0
    %1662 = vmatprep.subr.mxu0 0.0
    %1663 = vmatpush2.msra.mxu0 0.0
    %1664 = vmatprep.subr.mxu0 0.0
    %1665 = vmatpush2.msra.mxu0 0.0
    %1666 = vmatprep.subr.mxu0 0.0
    %1667 = vmatpush2.msra.mxu0 0.0
    %1668 = vmatprep.subr.mxu0 0.0
    %1669 = vmatpush2.msra.mxu0 0.0
    %1670 = vmatprep.subr.mxu0 0.0
    %1671 = vmatpush2.msra.mxu0 0.0
    %1672 = vmatprep.subr.mxu0 0.0
    %1673 = vmatpush2.msra.mxu0 0.0
    %1674 = vmatprep.subr.mxu0 0.0
    %1675 = vmatpush2.msra.mxu0 0.0
    %1676 = vmatprep.mubr.f32.mxu0 0.0
    %1677 = vmatmul.mubr.f32.gmra.mxu0 %v1607
    %v1678 = vpop.f32.mrf.mxu0
    %v1679 = vadd.f32 0.0, %v1678
    %v1680 = vpop.f32.mrf.mxu0
    %1681 = vmatprep.mubr.f32.mxu0 0.0
    %1682 = vmatmul.mubr.f32.gmra.mxu0 %v1610
    %v1683 = vpop.f32.mrf.mxu0
    %v1684 = vadd.f32 0.0, %v1683
    %v1685 = vpop.f32.mrf.mxu0
    %1686 = vdwg.mxu0
    %v1688 = vsel %vm521, %v1679, 0
    %v1691 = vsel %vm521, %v1684, 0
    %1693 = vmatprep.subr.mxu0 0.0
    %1694 = vmatpush1.msra.mxu0 0.0
    %1695 = vmatprep.subr.mxu0 0.0
    %1696 = vmatpush1.msra.mxu0 0.0
    %1697 = vmatprep.subr.mxu0 0.0
    %1698 = vmatpush1.msra.mxu0 0.0
    %1699 = vmatprep.subr.mxu0 0.0
    %1700 = vmatpush1.msra.mxu0 0.0
    %1701 = vmatprep.subr.mxu0 0.0
    %1702 = vmatpush1.msra.mxu0 0.0
    %1703 = vmatprep.subr.mxu0 0.0
    %1704 = vmatpush1.msra.mxu0 0.0
    %1705 = vmatprep.subr.mxu0 0.0
    %1706 = vmatpush1.msra.mxu0 0.0
    %1707 = vmatprep.subr.mxu0 0.0
    %1708 = vmatpush1.msra.mxu0 0.0
    %1709 = vmatprep.subr.mxu0 0.0
    %1710 = vmatpush1.msra.mxu0 0.0
    %1711 = vmatprep.subr.mxu0 0.0
    %1712 = vmatpush1.msra.mxu0 0.0
    %1713 = vmatprep.subr.mxu0 0.0
    %1714 = vmatpush1.msra.mxu0 0.0
    %1715 = vmatprep.subr.mxu0 0.0
    %1716 = vmatpush1.msra.mxu0 0.0
    %1717 = vmatprep.subr.mxu0 0.0
    %1718 = vmatpush1.msra.mxu0 0.0
    %1719 = vmatprep.subr.mxu0 0.0
    %1720 = vmatpush1.msra.mxu0 0.0
    %1721 = vmatprep.subr.mxu0 0.0
    %1722 = vmatpush1.msra.mxu0 %v1480
    %1723 = vmatprep.subr.mxu0 0.0
    %1724 = vmatpush1.msra.mxu0 %v1479
    %1725 = vmatprep.subr.mxu0 0.0
    %1726 = vmatpush2.msra.mxu0 0.0
    %1727 = vmatprep.subr.mxu0 0.0
    %1728 = vmatpush2.msra.mxu0 0.0
    %1729 = vmatprep.subr.mxu0 0.0
    %1730 = vmatpush2.msra.mxu0 0.0
    %1731 = vmatprep.subr.mxu0 0.0
    %1732 = vmatpush2.msra.mxu0 0.0
    %1733 = vmatprep.subr.mxu0 0.0
    %1734 = vmatpush2.msra.mxu0 0.0
    %1735 = vmatprep.subr.mxu0 0.0
    %1736 = vmatpush2.msra.mxu0 0.0
    %1737 = vmatprep.subr.mxu0 0.0
    %1738 = vmatpush2.msra.mxu0 0.0
    %1739 = vmatprep.subr.mxu0 0.0
    %1740 = vmatpush2.msra.mxu0 0.0
    %1741 = vmatprep.subr.mxu0 0.0
    %1742 = vmatpush2.msra.mxu0 0.0
    %1743 = vmatprep.subr.mxu0 0.0
    %1744 = vmatpush2.msra.mxu0 0.0
    %1745 = vmatprep.subr.mxu0 0.0
    %1746 = vmatpush2.msra.mxu0 0.0
    %1747 = vmatprep.subr.mxu0 0.0
    %1748 = vmatpush2.msra.mxu0 0.0
    %1749 = vmatprep.subr.mxu0 0.0
    %1750 = vmatpush2.msra.mxu0 0.0
    %1751 = vmatprep.subr.mxu0 0.0
    %1752 = vmatpush2.msra.mxu0 0.0
    %1753 = vmatprep.subr.mxu0 0.0
    %1754 = vmatpush2.msra.mxu0 0.0
    %1755 = vmatprep.subr.mxu0 0.0
    %1756 = vmatpush2.msra.mxu0 0.0
    %1757 = vmatprep.mubr.f32.mxu0 0.0
    %1758 = vmatmul.mubr.f32.gmra.mxu0 %v1688
    %v1759 = vpop.f32.mrf.mxu0
    %v1760 = vadd.f32 0.0, %v1759
    %v1761 = vpop.f32.mrf.mxu0
    %1762 = vmatprep.mubr.f32.mxu0 0.0
    %1763 = vmatmul.mubr.f32.gmra.mxu0 %v1691
    %v1764 = vpop.f32.mrf.mxu0
    %v1765 = vadd.f32 0.0, %v1764
    %v1766 = vpop.f32.mrf.mxu0
    %1767 = vdwg.mxu0
    %v1769 = vlaneseq
    %v1770 = vshrl.u32 %v1769, 7
    %v1771 = vsub.s32 0, %v1770
    %v1772 = vrot.slane %v1484, %v1771
    %v1774 = vadd.f32 %v1772, %v1760
    %v1775 = vadd.f32 %v1772, %v1765
    %1776 = vrot.lane.b32.xlu0 %v1470, 112
    %v1777 = vpop.permute.xlu0 %1776
    %1778 = vrot.lane.b32.xlu0 %v1475, 112
    %v1779 = vpop.permute.xlu0 %1778
    %1780 = vrot.lane.b32.xlu0 %v1470, 80
    %v1781 = vpop.permute.xlu0 %1780
    %1782 = vrot.lane.b32.xlu0 %v1475, 80
    %v1783 = vpop.permute.xlu0 %1782
    %v1784 = vsel %vm521, %v1777, 0
    %v1786 = vsel %vm521, %v1779, 0
    %v1788 = vsel %vm521, %v1781, 0
    %v1790 = vsel %vm521, %v1783, 0
    %1792 = vmatprep.subr.mxu0 0.0
    %1793 = vmatpush1.xpose.msra.mxu0 0.0
    %1794 = vmatprep.subr.mxu0 0.0
    %1795 = vmatpush1.xpose.msra.mxu0 0.0
    %1796 = vmatprep.subr.mxu0 0.0
    %1797 = vmatpush1.xpose.msra.mxu0 0.0
    %1798 = vmatprep.subr.mxu0 0.0
    %1799 = vmatpush1.xpose.msra.mxu0 0.0
    %1800 = vmatprep.subr.mxu0 0.0
    %1801 = vmatpush1.xpose.msra.mxu0 0.0
    %1802 = vmatprep.subr.mxu0 0.0
    %1803 = vmatpush1.xpose.msra.mxu0 0.0
    %1804 = vmatprep.subr.mxu0 0.0
    %1805 = vmatpush1.xpose.msra.mxu0 0.0
    %1806 = vmatprep.subr.mxu0 0.0
    %1807 = vmatpush1.xpose.msra.mxu0 0.0
    %1808 = vmatprep.subr.mxu0 0.0
    %1809 = vmatpush1.xpose.msra.mxu0 0.0
    %1810 = vmatprep.subr.mxu0 0.0
    %1811 = vmatpush1.xpose.msra.mxu0 0.0
    %1812 = vmatprep.subr.mxu0 0.0
    %1813 = vmatpush1.xpose.msra.mxu0 0.0
    %1814 = vmatprep.subr.mxu0 0.0
    %1815 = vmatpush1.xpose.msra.mxu0 0.0
    %1816 = vmatprep.subr.mxu0 0.0
    %1817 = vmatpush1.xpose.msra.mxu0 0.0
    %1818 = vmatprep.subr.mxu0 0.0
    %1819 = vmatpush1.xpose.msra.mxu0 0.0
    %1820 = vmatprep.subr.mxu0 0.0
    %1821 = vmatpush1.xpose.msra.mxu0 %v1790
    %1822 = vmatprep.subr.mxu0 0.0
    %1823 = vmatpush1.xpose.msra.mxu0 %v1788
    %1824 = vmatprep.subr.mxu0 0.0
    %1825 = vmatpush2.xpose.msra.mxu0 0.0
    %1826 = vmatprep.subr.mxu0 0.0
    %1827 = vmatpush2.xpose.msra.mxu0 0.0
    %1828 = vmatprep.subr.mxu0 0.0
    %1829 = vmatpush2.xpose.msra.mxu0 0.0
    %1830 = vmatprep.subr.mxu0 0.0
    %1831 = vmatpush2.xpose.msra.mxu0 0.0
    %1832 = vmatprep.subr.mxu0 0.0
    %1833 = vmatpush2.xpose.msra.mxu0 0.0
    %1834 = vmatprep.subr.mxu0 0.0
    %1835 = vmatpush2.xpose.msra.mxu0 0.0
    %1836 = vmatprep.subr.mxu0 0.0
    %1837 = vmatpush2.xpose.msra.mxu0 0.0
    %1838 = vmatprep.subr.mxu0 0.0
    %1839 = vmatpush2.xpose.msra.mxu0 0.0
    %1840 = vmatprep.subr.mxu0 0.0
    %1841 = vmatpush2.xpose.msra.mxu0 0.0
    %1842 = vmatprep.subr.mxu0 0.0
    %1843 = vmatpush2.xpose.msra.mxu0 0.0
    %1844 = vmatprep.subr.mxu0 0.0
    %1845 = vmatpush2.xpose.msra.mxu0 0.0
    %1846 = vmatprep.subr.mxu0 0.0
    %1847 = vmatpush2.xpose.msra.mxu0 0.0
    %1848 = vmatprep.subr.mxu0 0.0
    %1849 = vmatpush2.xpose.msra.mxu0 0.0
    %1850 = vmatprep.subr.mxu0 0.0
    %1851 = vmatpush2.xpose.msra.mxu0 0.0
    %1852 = vmatprep.subr.mxu0 0.0
    %1853 = vmatpush2.xpose.msra.mxu0 0.0
    %1854 = vmatprep.subr.mxu0 0.0
    %1855 = vmatpush2.xpose.msra.mxu0 0.0
    %1856 = vmatprep.mubr.f32.mxu0 0.0
    %1857 = vmatmul.mubr.f32.gmra.mxu0 %v1784
    %v1858 = vpop.f32.mrf.mxu0
    %v1859 = vadd.f32 0.0, %v1858
    %v1860 = vpop.f32.mrf.mxu0
    %1861 = vmatprep.mubr.f32.mxu0 0.0
    %1862 = vmatmul.mubr.f32.gmra.mxu0 %v1786
    %v1863 = vpop.f32.mrf.mxu0
    %v1864 = vadd.f32 0.0, %v1863
    %v1865 = vpop.f32.mrf.mxu0
    %1866 = vdwg.mxu0
    %v1867 = vmul.f32 %v1859, 0.25
    %v1868 = vmul.f32 %v1864, 0.25
    %v1869 = vadd.f32 %v1867, %v416
    %v1870 = vadd.f32 %v1868, %v417
    %v1871 = vsel %vm521, %v1869, -inf
    %1872 = vmax.xlane.f32.xlu0 %v1871
    %v1873 = vpop.xlane.xlu0 %1872
    %v1874 = vsel %vm521, %v1870, -inf
    %1875 = vmax.xlane.f32.xlu0 %v1874
    %v1876 = vpop.xlane.xlu0 %1875
    %v1877 = vsub.f32 %v1869, %v1873
    %v1878 = vsub.f32 %v1870, %v1876
    %v1879 = vmul.f32 %v1877, 1.442695
    %v1880 = vpow.pop %v1879
    %v1881 = vmul.f32 %v1878, 1.442695
    %v1882 = vpow.pop %v1881
    %v1883 = vsel %vm521, %v1880, 0.0
    %1884 = vadd.xlane.f32.xlu0 %v1883
    %v1885 = vpop.xlane.xlu0 %1884
    %v1886 = vsel %vm521, %v1882, 0.0
    %1887 = vadd.xlane.f32.xlu0 %v1886
    %v1888 = vpop.xlane.xlu0 %1887
    %v1889 = vrcp.pop %v1885
    %v1890 = vrcp.pop %v1888
    %v1891 = vmul.f32 %v1880, %v1889
    %v1892 = vmul.f32 %v1882, %v1890
    %1893 = vrot.lane.b32.xlu0 %v1470, 48
    %v1894 = vpop.permute.xlu0 %1893
    %1895 = vrot.lane.b32.xlu0 %v1475, 48
    %v1896 = vpop.permute.xlu0 %1895
    %v1900 = vsel %vm521, %v1891, 0
    %v1903 = vsel %vm521, %v1892, 0
    %1905 = vmatprep.subr.mxu0 0.0
    %1906 = vmatpush1.msra.mxu0 0.0
    %1907 = vmatprep.subr.mxu0 0.0
    %1908 = vmatpush1.msra.mxu0 0.0
    %1909 = vmatprep.subr.mxu0 0.0
    %1910 = vmatpush1.msra.mxu0 0.0
    %1911 = vmatprep.subr.mxu0 0.0
    %1912 = vmatpush1.msra.mxu0 0.0
    %1913 = vmatprep.subr.mxu0 0.0
    %1914 = vmatpush1.msra.mxu0 0.0
    %1915 = vmatprep.subr.mxu0 0.0
    %1916 = vmatpush1.msra.mxu0 0.0
    %1917 = vmatprep.subr.mxu0 0.0
    %1918 = vmatpush1.msra.mxu0 0.0
    %1919 = vmatprep.subr.mxu0 0.0
    %1920 = vmatpush1.msra.mxu0 0.0
    %1921 = vmatprep.subr.mxu0 0.0
    %1922 = vmatpush1.msra.mxu0 0.0
    %1923 = vmatprep.subr.mxu0 0.0
    %1924 = vmatpush1.msra.mxu0 0.0
    %1925 = vmatprep.subr.mxu0 0.0
    %1926 = vmatpush1.msra.mxu0 0.0
    %1927 = vmatprep.subr.mxu0 0.0
    %1928 = vmatpush1.msra.mxu0 0.0
    %1929 = vmatprep.subr.mxu0 0.0
    %1930 = vmatpush1.msra.mxu0 0.0
    %1931 = vmatprep.subr.mxu0 0.0
    %1932 = vmatpush1.msra.mxu0 0.0
    %1933 = vmatprep.subr.mxu0 0.0
    %1934 = vmatpush1.msra.mxu0 %v1896
    %1935 = vmatprep.subr.mxu0 0.0
    %1936 = vmatpush1.msra.mxu0 %v1894
    %1937 = vmatprep.subr.mxu0 0.0
    %1938 = vmatpush2.msra.mxu0 0.0
    %1939 = vmatprep.subr.mxu0 0.0
    %1940 = vmatpush2.msra.mxu0 0.0
    %1941 = vmatprep.subr.mxu0 0.0
    %1942 = vmatpush2.msra.mxu0 0.0
    %1943 = vmatprep.subr.mxu0 0.0
    %1944 = vmatpush2.msra.mxu0 0.0
    %1945 = vmatprep.subr.mxu0 0.0
    %1946 = vmatpush2.msra.mxu0 0.0
    %1947 = vmatprep.subr.mxu0 0.0
    %1948 = vmatpush2.msra.mxu0 0.0
    %1949 = vmatprep.subr.mxu0 0.0
    %1950 = vmatpush2.msra.mxu0 0.0
    %1951 = vmatprep.subr.mxu0 0.0
    %1952 = vmatpush2.msra.mxu0 0.0
    %1953 = vmatprep.subr.mxu0 0.0
    %1954 = vmatpush2.msra.mxu0 0.0
    %1955 = vmatprep.subr.mxu0 0.0
    %1956 = vmatpush2.msra.mxu0 0.0
    %1957 = vmatprep.subr.mxu0 0.0
    %1958 = vmatpush2.msra.mxu0 0.0
    %1959 = vmatprep.subr.mxu0 0.0
    %1960 = vmatpush2.msra.mxu0 0.0
    %1961 = vmatprep.subr.mxu0 0.0
    %1962 = vmatpush2.msra.mxu0 0.0
    %1963 = vmatprep.subr.mxu0 0.0
    %1964 = vmatpush2.msra.mxu0 0.0
    %1965 = vmatprep.subr.mxu0 0.0
    %1966 = vmatpush2.msra.mxu0 0.0
    %1967 = vmatprep.subr.mxu0 0.0
    %1968 = vmatpush2.msra.mxu0 0.0
    %1969 = vmatprep.mubr.f32.mxu0 0.0
    %1970 = vmatmul.mubr.f32.gmra.mxu0 %v1900
    %v1971 = vpop.f32.mrf.mxu0
    %v1972 = vadd.f32 0.0, %v1971
    %v1973 = vpop.f32.mrf.mxu0
    %1974 = vmatprep.mubr.f32.mxu0 0.0
    %1975 = vmatmul.mubr.f32.gmra.mxu0 %v1903
    %v1976 = vpop.f32.mrf.mxu0
    %v1977 = vadd.f32 0.0, %v1976
    %v1978 = vpop.f32.mrf.mxu0
    %1979 = vdwg.mxu0
    %v1981 = vsel %vm521, %v1972, 0
    %v1984 = vsel %vm521, %v1977, 0
    %1986 = vmatprep.subr.mxu0 0.0
    %1987 = vmatpush1.msra.mxu0 0.0
    %1988 = vmatprep.subr.mxu0 0.0
    %1989 = vmatpush1.msra.mxu0 0.0
    %1990 = vmatprep.subr.mxu0 0.0
    %1991 = vmatpush1.msra.mxu0 0.0
    %1992 = vmatprep.subr.mxu0 0.0
    %1993 = vmatpush1.msra.mxu0 0.0
    %1994 = vmatprep.subr.mxu0 0.0
    %1995 = vmatpush1.msra.mxu0 0.0
    %1996 = vmatprep.subr.mxu0 0.0
    %1997 = vmatpush1.msra.mxu0 0.0
    %1998 = vmatprep.subr.mxu0 0.0
    %1999 = vmatpush1.msra.mxu0 0.0
    %2000 = vmatprep.subr.mxu0 0.0
    %2001 = vmatpush1.msra.mxu0 0.0
    %2002 = vmatprep.subr.mxu0 0.0
    %2003 = vmatpush1.msra.mxu0 0.0
    %2004 = vmatprep.subr.mxu0 0.0
    %2005 = vmatpush1.msra.mxu0 0.0
    %2006 = vmatprep.subr.mxu0 0.0
    %2007 = vmatpush1.msra.mxu0 0.0
    %2008 = vmatprep.subr.mxu0 0.0
    %2009 = vmatpush1.msra.mxu0 0.0
    %2010 = vmatprep.subr.mxu0 0.0
    %2011 = vmatpush1.msra.mxu0 0.0
    %2012 = vmatprep.subr.mxu0 0.0
    %2013 = vmatpush1.msra.mxu0 0.0
    %2014 = vmatprep.subr.mxu0 0.0
    %2015 = vmatpush1.msra.mxu0 %v1482
    %2016 = vmatprep.subr.mxu0 0.0
    %2017 = vmatpush1.msra.mxu0 %v1481
    %2018 = vmatprep.subr.mxu0 0.0
    %2019 = vmatpush2.msra.mxu0 0.0
    %2020 = vmatprep.subr.mxu0 0.0
    %2021 = vmatpush2.msra.mxu0 0.0
    %2022 = vmatprep.subr.mxu0 0.0
    %2023 = vmatpush2.msra.mxu0 0.0
    %2024 = vmatprep.subr.mxu0 0.0
    %2025 = vmatpush2.msra.mxu0 0.0
    %2026 = vmatprep.subr.mxu0 0.0
    %2027 = vmatpush2.msra.mxu0 0.0
    %2028 = vmatprep.subr.mxu0 0.0
    %2029 = vmatpush2.msra.mxu0 0.0
    %2030 = vmatprep.subr.mxu0 0.0
    %2031 = vmatpush2.msra.mxu0 0.0
    %2032 = vmatprep.subr.mxu0 0.0
    %2033 = vmatpush2.msra.mxu0 0.0
    %2034 = vmatprep.subr.mxu0 0.0
    %2035 = vmatpush2.msra.mxu0 0.0
    %2036 = vmatprep.subr.mxu0 0.0
    %2037 = vmatpush2.msra.mxu0 0.0
    %2038 = vmatprep.subr.mxu0 0.0
    %2039 = vmatpush2.msra.mxu0 0.0
    %2040 = vmatprep.subr.mxu0 0.0
    %2041 = vmatpush2.msra.mxu0 0.0
    %2042 = vmatprep.subr.mxu0 0.0
    %2043 = vmatpush2.msra.mxu0 0.0
    %2044 = vmatprep.subr.mxu0 0.0
    %2045 = vmatpush2.msra.mxu0 0.0
    %2046 = vmatprep.subr.mxu0 0.0
    %2047 = vmatpush2.msra.mxu0 0.0
    %2048 = vmatprep.subr.mxu0 0.0
    %2049 = vmatpush2.msra.mxu0 0.0
    %2050 = vmatprep.mubr.f32.mxu0 0.0
    %2051 = vmatmul.mubr.f32.gmra.mxu0 %v1981
    %v2052 = vpop.f32.mrf.mxu0
    %v2053 = vadd.f32 0.0, %v2052
    %v2054 = vpop.f32.mrf.mxu0
    %2055 = vmatprep.mubr.f32.mxu0 0.0
    %2056 = vmatmul.mubr.f32.gmra.mxu0 %v1984
    %v2057 = vpop.f32.mrf.mxu0
    %v2058 = vadd.f32 0.0, %v2057
    %v2059 = vpop.f32.mrf.mxu0
    %2060 = vdwg.mxu0
    %v2061 = vadd.f32 %v1774, %v2053
    %v2062 = vadd.f32 %v1775, %v2058
    %v2063 = vadd.f32 %v2061, %v1382
    %v2064 = vadd.f32 %v2062, %v1383
    %s2065 = scalar_lea.vmem %s13, 1
    %v2066 = vld [vmem:[%s2065] sm:$0x1]
    %s2067 = scalar_lea.vmem %s14, 1
    %v2068 = vld [vmem:[%s2067] sm:$0x1]
    %v2069 = vsel %vm372, %v2063, 0.0
    %2070 = vadd.xlane.f32.xlu0 %v2069
    %v2071 = vpop.xlane.xlu0 %2070
    %v2072 = vsel %vm372, %v2064, 0.0
    %2073 = vadd.xlane.f32.xlu0 %v2072
    %v2074 = vpop.xlane.xlu0 %2073
    %v2075 = vmul.f32 %v2071, %v379
    %v2076 = vmul.f32 %v2074, %v379
    %v2077 = vsub.f32 %v2063, %v2075
    %v2078 = vsub.f32 %v2064, %v2076
    %v2079 = vmul.f32 %v2077, %v2077
    %v2080 = vmul.f32 %v2078, %v2078
    %v2081 = vsel %vm372, %v2079, 0.0
    %2082 = vadd.xlane.f32.xlu0 %v2081
    %v2083 = vpop.xlane.xlu0 %2082
    %v2084 = vsel %vm372, %v2080, 0.0
    %2085 = vadd.xlane.f32.xlu0 %v2084
    %v2086 = vpop.xlane.xlu0 %2085
    %v2087 = vmul.f32 %v2083, %v379
    %v2088 = vmul.f32 %v2086, %v379
    %v2089 = vadd.f32 %v2087, 1e-06
    %v2090 = vadd.f32 %v2088, 1e-06
    %v2091 = vrsqrt.pop %v2089
    %v2092 = vrsqrt.pop %v2090
    %v2093 = vmul.f32 %v2077, %v2091
    %v2094 = vmul.f32 %v2078, %v2092
    %v2096 = vlaneseq
    %v2097 = vshrl.u32 %v2096, 7
    %v2098 = vsub.s32 0, %v2097
    %v2099 = vrot.slane %v2066, %v2098
    %v2101 = vmul.f32 %v2093, %v2099
    %v2102 = vmul.f32 %v2094, %v2099
    %v2104 = vlaneseq
    %v2105 = vshrl.u32 %v2104, 7
    %v2106 = vsub.s32 0, %v2105
    %v2107 = vrot.slane %v2068, %v2106
    %v2109 = vadd.f32 %v2101, %v2107
    %v2110 = vadd.f32 %v2102, %v2107
    %s2111 = scalar_lea.vmem %s15, 32
    %v2112 = vld [vmem:[%s2111] sm:$0xff]
    %v2113 = vld [vmem:[%s2111 + $0x8] sm:$0xff]
    %v2114 = vld [vmem:[%s2111 + $0x10] sm:$0xff]
    %v2115 = vld [vmem:[%s2111 + $0x18] sm:$0xff]
    %s2116 = scalar_lea.vmem %s16, 1
    %v2117 = vld [vmem:[%s2116] sm:$0x1]
    %v2119 = vlaneseq
    %v2120 = vshrl.u32 %v2119, 7
    %v2121 = vsub.s32 0, %v2120
    %v2122 = vrot.slane %v2117, %v2121
    %v2125 = vsel %vm372, %v2109, 0
    %v2128 = vsel %vm372, %v2110, 0
    %2130 = vmatprep.subr.mxu0 0.0
    %2131 = vmatpush1.msra.mxu0 0.0
    %2132 = vmatprep.subr.mxu0 0.0
    %2133 = vmatpush1.msra.mxu0 0.0
    %2134 = vmatprep.subr.mxu0 0.0
    %2135 = vmatpush1.msra.mxu0 0.0
    %2136 = vmatprep.subr.mxu0 0.0
    %2137 = vmatpush1.msra.mxu0 0.0
    %2138 = vmatprep.subr.mxu0 0.0
    %2139 = vmatpush1.msra.mxu0 0.0
    %2140 = vmatprep.subr.mxu0 0.0
    %2141 = vmatpush1.msra.mxu0 0.0
    %2142 = vmatprep.subr.mxu0 0.0
    %2143 = vmatpush1.msra.mxu0 0.0
    %2144 = vmatprep.subr.mxu0 0.0
    %2145 = vmatpush1.msra.mxu0 0.0
    %2146 = vmatprep.subr.mxu0 0.0
    %2147 = vmatpush1.msra.mxu0 0.0
    %2148 = vmatprep.subr.mxu0 0.0
    %2149 = vmatpush1.msra.mxu0 0.0
    %2150 = vmatprep.subr.mxu0 0.0
    %2151 = vmatpush1.msra.mxu0 0.0
    %2152 = vmatprep.subr.mxu0 0.0
    %2153 = vmatpush1.msra.mxu0 0.0
    %2154 = vmatprep.subr.mxu0 0.0
    %2155 = vmatpush1.msra.mxu0 %v2115
    %2156 = vmatprep.subr.mxu0 0.0
    %2157 = vmatpush1.msra.mxu0 %v2114
    %2158 = vmatprep.subr.mxu0 0.0
    %2159 = vmatpush1.msra.mxu0 %v2113
    %2160 = vmatprep.subr.mxu0 0.0
    %2161 = vmatpush1.msra.mxu0 %v2112
    %2162 = vmatprep.subr.mxu0 0.0
    %2163 = vmatpush2.msra.mxu0 0.0
    %2164 = vmatprep.subr.mxu0 0.0
    %2165 = vmatpush2.msra.mxu0 0.0
    %2166 = vmatprep.subr.mxu0 0.0
    %2167 = vmatpush2.msra.mxu0 0.0
    %2168 = vmatprep.subr.mxu0 0.0
    %2169 = vmatpush2.msra.mxu0 0.0
    %2170 = vmatprep.subr.mxu0 0.0
    %2171 = vmatpush2.msra.mxu0 0.0
    %2172 = vmatprep.subr.mxu0 0.0
    %2173 = vmatpush2.msra.mxu0 0.0
    %2174 = vmatprep.subr.mxu0 0.0
    %2175 = vmatpush2.msra.mxu0 0.0
    %2176 = vmatprep.subr.mxu0 0.0
    %2177 = vmatpush2.msra.mxu0 0.0
    %2178 = vmatprep.subr.mxu0 0.0
    %2179 = vmatpush2.msra.mxu0 0.0
    %2180 = vmatprep.subr.mxu0 0.0
    %2181 = vmatpush2.msra.mxu0 0.0
    %2182 = vmatprep.subr.mxu0 0.0
    %2183 = vmatpush2.msra.mxu0 0.0
    %2184 = vmatprep.subr.mxu0 0.0
    %2185 = vmatpush2.msra.mxu0 0.0
    %2186 = vmatprep.subr.mxu0 0.0
    %2187 = vmatpush2.msra.mxu0 0.0
    %2188 = vmatprep.subr.mxu0 0.0
    %2189 = vmatpush2.msra.mxu0 0.0
    %2190 = vmatprep.subr.mxu0 0.0
    %2191 = vmatpush2.msra.mxu0 0.0
    %2192 = vmatprep.subr.mxu0 0.0
    %2193 = vmatpush2.msra.mxu0 0.0
    %2194 = vmatprep.mubr.f32.mxu0 0.0
    %2195 = vmatmul.mubr.f32.gmra.mxu0 %v2125
    %v2196 = vpop.f32.mrf.mxu0
    %v2197 = vadd.f32 %v2122, %v2196
    %v2198 = vpop.f32.mrf.mxu0
    %2199 = vmatprep.mubr.f32.mxu0 0.0
    %2200 = vmatmul.mubr.f32.gmra.mxu0 %v2128
    %v2201 = vpop.f32.mrf.mxu0
    %v2202 = vadd.f32 %v2122, %v2201
    %v2203 = vpop.f32.mrf.mxu0
    %2204 = vdwg.mxu0
    %v2205 = vmul.f32 %v2197, 0.5
    %v2206 = vmul.f32 %v2202, 0.5
    %v2207 = vmul.f32 %v2197, 0.70710677
    %v2208 = vmul.f32 %v2202, 0.70710677
    %v2209 = verf.f32.pop %v2207
    %v2210 = verf.f32.pop %v2208
    %v2211 = vadd.f32 %v2209, 1.0
    %v2212 = vadd.f32 %v2210, 1.0
    %v2213 = vmul.f32 %v2205, %v2211
    %v2214 = vmul.f32 %v2206, %v2212
    %s2215 = scalar_lea.vmem %s17, 64
    %v2216 = vld [vmem:[%s2215] sm:$0xff]
    %v2217 = vld [vmem:[%s2215 + $0x8] sm:$0xff]
    %v2218 = vld [vmem:[%s2215 + $0x10] sm:$0xff]
    %v2219 = vld [vmem:[%s2215 + $0x18] sm:$0xff]
    %v2220 = vld [vmem:[%s2215 + $0x20] sm:$0xff]
    %v2221 = vld [vmem:[%s2215 + $0x28] sm:$0xff]
    %v2222 = vld [vmem:[%s2215 + $0x30] sm:$0xff]
    %v2223 = vld [vmem:[%s2215 + $0x38] sm:$0xff]
    %s2224 = scalar_lea.vmem %s18, 1
    %v2225 = vld [vmem:[%s2224] sm:$0x1]
    %v2227 = vlaneseq
    %v2228 = vshrl.u32 %v2227, 7
    %v2229 = vsub.s32 0, %v2228
    %v2230 = vrot.slane %v2225, %v2229
    %v2233 = vsel %vm190, %v2213, 0
    %v2236 = vsel %vm190, %v2214, 0
    %2238 = vmatprep.subr.mxu0 0.0
    %2239 = vmatpush1.msra.mxu0 0.0
    %2240 = vmatprep.subr.mxu0 0.0
    %2241 = vmatpush1.msra.mxu0 0.0
    %2242 = vmatprep.subr.mxu0 0.0
    %2243 = vmatpush1.msra.mxu0 0.0
    %2244 = vmatprep.subr.mxu0 0.0
    %2245 = vmatpush1.msra.mxu0 0.0
    %2246 = vmatprep.subr.mxu0 0.0
    %2247 = vmatpush1.msra.mxu0 0.0
    %2248 = vmatprep.subr.mxu0 0.0
    %2249 = vmatpush1.msra.mxu0 0.0
    %2250 = vmatprep.subr.mxu0 0.0
    %2251 = vmatpush1.msra.mxu0 0.0
    %2252 = vmatprep.subr.mxu0 0.0
    %2253 = vmatpush1.msra.mxu0 0.0
    %2254 = vmatprep.subr.mxu0 0.0
    %2255 = vmatpush1.msra.mxu0 %v2223
    %2256 = vmatprep.subr.mxu0 0.0
    %2257 = vmatpush1.msra.mxu0 %v2222
    %2258 = vmatprep.subr.mxu0 0.0
    %2259 = vmatpush1.msra.mxu0 %v2221
    %2260 = vmatprep.subr.mxu0 0.0
    %2261 = vmatpush1.msra.mxu0 %v2220
    %2262 = vmatprep.subr.mxu0 0.0
    %2263 = vmatpush1.msra.mxu0 %v2219
    %2264 = vmatprep.subr.mxu0 0.0
    %2265 = vmatpush1.msra.mxu0 %v2218
    %2266 = vmatprep.subr.mxu0 0.0
    %2267 = vmatpush1.msra.mxu0 %v2217
    %2268 = vmatprep.subr.mxu0 0.0
    %2269 = vmatpush1.msra.mxu0 %v2216
    %2270 = vmatprep.subr.mxu0 0.0
    %2271 = vmatpush2.msra.mxu0 0.0
    %2272 = vmatprep.subr.mxu0 0.0
    %2273 = vmatpush2.msra.mxu0 0.0
    %2274 = vmatprep.subr.mxu0 0.0
    %2275 = vmatpush2.msra.mxu0 0.0
    %2276 = vmatprep.subr.mxu0 0.0
    %2277 = vmatpush2.msra.mxu0 0.0
    %2278 = vmatprep.subr.mxu0 0.0
    %2279 = vmatpush2.msra.mxu0 0.0
    %2280 = vmatprep.subr.mxu0 0.0
    %2281 = vmatpush2.msra.mxu0 0.0
    %2282 = vmatprep.subr.mxu0 0.0
    %2283 = vmatpush2.msra.mxu0 0.0
    %2284 = vmatprep.subr.mxu0 0.0
    %2285 = vmatpush2.msra.mxu0 0.0
    %2286 = vmatprep.subr.mxu0 0.0
    %2287 = vmatpush2.msra.mxu0 0.0
    %2288 = vmatprep.subr.mxu0 0.0
    %2289 = vmatpush2.msra.mxu0 0.0
    %2290 = vmatprep.subr.mxu0 0.0
    %2291 = vmatpush2.msra.mxu0 0.0
    %2292 = vmatprep.subr.mxu0 0.0
    %2293 = vmatpush2.msra.mxu0 0.0
    %2294 = vmatprep.subr.mxu0 0.0
    %2295 = vmatpush2.msra.mxu0 0.0
    %2296 = vmatprep.subr.mxu0 0.0
    %2297 = vmatpush2.msra.mxu0 0.0
    %2298 = vmatprep.subr.mxu0 0.0
    %2299 = vmatpush2.msra.mxu0 0.0
    %2300 = vmatprep.subr.mxu0 0.0
    %2301 = vmatpush2.msra.mxu0 0.0
    %2302 = vmatprep.mubr.f32.mxu0 0.0
    %2303 = vmatmul.mubr.f32.gmra.mxu0 %v2233
    %v2304 = vpop.f32.mrf.mxu0
    %v2305 = vadd.f32 %v2230, %v2304
    %v2306 = vpop.f32.mrf.mxu0
    %2307 = vmatprep.mubr.f32.mxu0 0.0
    %2308 = vmatmul.mubr.f32.gmra.mxu0 %v2236
    %v2309 = vpop.f32.mrf.mxu0
    %v2310 = vadd.f32 %v2230, %v2309
    %v2311 = vpop.f32.mrf.mxu0
    %2312 = vdwg.mxu0
    %v2313 = vadd.f32 %v2305, %v2109
    %v2314 = vadd.f32 %v2310, %v2110
    %s2315 = scalar_lea.vmem %s19, 1
    %v2316 = vld [vmem:[%s2315] sm:$0x1]
    %s2317 = scalar_lea.vmem %s20, 1
    %v2318 = vld [vmem:[%s2317] sm:$0x1]
    %v2319 = vsel %vm372, %v2313, 0.0
    %2320 = vadd.xlane.f32.xlu0 %v2319
    %v2321 = vpop.xlane.xlu0 %2320
    %v2322 = vsel %vm372, %v2314, 0.0
    %2323 = vadd.xlane.f32.xlu0 %v2322
    %v2324 = vpop.xlane.xlu0 %2323
    %v2325 = vmul.f32 %v2321, %v379
    %v2326 = vmul.f32 %v2324, %v379
    %v2327 = vsub.f32 %v2313, %v2325
    %v2328 = vsub.f32 %v2314, %v2326
    %v2329 = vmul.f32 %v2327, %v2327
    %v2330 = vmul.f32 %v2328, %v2328
    %v2331 = vsel %vm372, %v2329, 0.0
    %2332 = vadd.xlane.f32.xlu0 %v2331
    %v2333 = vpop.xlane.xlu0 %2332
    %v2334 = vsel %vm372, %v2330, 0.0
    %2335 = vadd.xlane.f32.xlu0 %v2334
    %v2336 = vpop.xlane.xlu0 %2335
    %v2337 = vmul.f32 %v2333, %v379
    %v2338 = vmul.f32 %v2336, %v379
    %v2339 = vadd.f32 %v2337, 1e-06
    %v2340 = vadd.f32 %v2338, 1e-06
    %v2341 = vrsqrt.pop %v2339
    %v2342 = vrsqrt.pop %v2340
    %v2343 = vmul.f32 %v2327, %v2341
    %v2344 = vmul.f32 %v2328, %v2342
    %v2346 = vlaneseq
    %v2347 = vshrl.u32 %v2346, 7
    %v2348 = vsub.s32 0, %v2347
    %v2349 = vrot.slane %v2316, %v2348
    %v2351 = vmul.f32 %v2343, %v2349
    %v2352 = vmul.f32 %v2344, %v2349
    %v2354 = vlaneseq
    %v2355 = vshrl.u32 %v2354, 7
    %v2356 = vsub.s32 0, %v2355
    %v2357 = vrot.slane %v2318, %v2356
    %v2359 = vadd.f32 %v2351, %v2357
    %v2360 = vadd.f32 %v2352, %v2357
    %2361 = vst.msk [vmem:[#allocation2] sm:$0xff] %vm372, %v2359
    %2362 = vst.msk [vmem:[#allocation2 + $0x8] sm:$0xff] %vm372, %v2360
    // Predicated region
    $region86: #{sequence_encoder.1} parent=1 // pred_check
      _
    $region87: #{sequence_encoder.1} parent=1 // pred_check_branch
      %2364 = sbr.rel (0) target = $region89
    $region88: #{sequence_encoder.1} parent=1 // pred_region
      %s2366 = ssub.s32 256, 256
      %2367 = vsyncadd [#allocation3], %s2366
      %s2368 = sshll.u32 [#allocation2], 4
      %s2369 = int_to_ptr.vmem [resolvable:$true] %s2368
      %2374 = dma.vmem_to_hbm [thread:$0]  %s2369, 256, %s21, [#allocation3], 128, 128, 8
    $region89: #{sequence_encoder.1} parent=1 // pred_fallthru
      _
    // Predicated region
    $region90: #{sequence_encoder.1} parent=1 // pred_check
      _
    $region91: #{sequence_encoder.1} parent=1 // pred_check_branch
      %2376 = sbr.rel (0) target = $region93
    $region92: #{sequence_encoder.1} parent=1 // pred_region
      %2377 = dma.done [#allocation3], 256
    $region93: #{sequence_encoder.1} parent=1 // pred_fallthru
      _
    %2378 = vsyncpa [#allocation3], 1

</llo_original>
